<compile_context>
chip_gen: v6e
topology: v6e:2x2x1
jax: 0.10.0
libtpu: 0.0.40
codegen_flags: <defaults>
</compile_context>

<pallas_src>
import jax
import jax.numpy as jnp
from jax.experimental import pallas as pl
from jax.experimental.pallas import tpu as pltpu


def _round_up(n, m):
    return ((n + m - 1) // m) * m


def _gin_layer(adj, x, w, b, nzk, cnt, *, eps, relu, out_dtype, tile):
    """One fused GIN layer: out = [relu]( A @ (x @ W) + (1+eps)*(x @ W) + b ).

    adj : [n_pad, n_pad] bf16 dense adjacency (A[i, j] = #edges j -> i).
    x   : [n_pad, f_in]  bf16 node features (f_in multiple of 128).
    w   : [f_in, f_out]  bf16 weight (f_out multiple of 128), VMEM-resident.
    b   : [1, f_out]     f32 bias.
    nzk : [nt, nt] int32 per-row-tile compacted nonzero k-tile indices,
          padded by repeating the last valid index (DMA elided for repeats).
    cnt : [nt] int32 number of valid entries per row of nzk (>= 1).
    """
    n_pad = adj.shape[0]
    f_in = x.shape[1]
    f_out = w.shape[1]
    nt = n_pad // tile
    assert n_pad % tile == 0
    one_plus_eps = float(1.0 + eps)

    def kernel(nzk_ref, cnt_ref, a_ref, x_ref, w_ref, b_ref, o_ref, acc_ref):
        i = pl.program_id(0)
        k = pl.program_id(1)

        @pl.when(k == 0)
        def _init():
            acc_ref[...] = jnp.zeros_like(acc_ref)

        @pl.when(k < cnt_ref[i])
        def _accumulate():
            # Fused projection on the MXU: p = x[k-tile] @ W (f32 accum).
            p = jnp.dot(x_ref[...], w_ref[...],
                        preferred_element_type=jnp.float32)
            # Neighbor aggregation over this adjacency tile.
            agg = jnp.dot(a_ref[...], p.astype(jnp.bfloat16),
                          preferred_element_type=jnp.float32)
            # GIN self term, added exactly in f32 on the diagonal k-tile only.
            is_diag = nzk_ref[i, k] == i
            scale = jnp.where(is_diag, jnp.float32(one_plus_eps),
                              jnp.float32(0.0))
            acc_ref[...] += agg + scale * p

        @pl.when(k == pl.num_programs(1) - 1)
        def _finalize():
            out = acc_ref[...] + b_ref[...].astype(jnp.float32)
            if relu:
                out = jnp.maximum(out, 0.0)
            o_ref[...] = out.astype(o_ref.dtype)

    # index_maps receive the scalar-prefetch refs as trailing positional args.
    a_map = lambda i, k, nzk_r, cnt_r: (i, nzk_r[i, k])
    x_map = lambda i, k, nzk_r, cnt_r: (nzk_r[i, k], 0)
    w_map = lambda i, k, nzk_r, cnt_r: (0, 0)
    b_map = lambda i, k, nzk_r, cnt_r: (0, 0)
    o_map = lambda i, k, nzk_r, cnt_r: (i, 0)

    grid_spec = pltpu.PrefetchScalarGridSpec(
        num_scalar_prefetch=2,
        grid=(nt, nt),
        in_specs=[
            # TODO(synk): sweep pipeline_mode=pl.Buffered(3) on the adjacency
            # spec once runs of skipped tiles leave the DMA exposed.
            pl.BlockSpec((tile, tile), a_map),
            pl.BlockSpec((tile, f_in), x_map),
            pl.BlockSpec((f_in, f_out), w_map),
            pl.BlockSpec((1, f_out), b_map),
        ],
        out_specs=pl.BlockSpec((tile, f_out), o_map),
        scratch_shapes=[pltpu.VMEM((tile, f_out), jnp.float32)],
    )

    return pl.pallas_call(
        kernel,
        out_shape=jax.ShapeDtypeStruct((n_pad, f_out), out_dtype),
        grid_spec=grid_spec,
        compiler_params=pltpu.CompilerParams(
            dimension_semantics=("parallel", "arbitrary"),
            vmem_limit_bytes=32 * 1024 * 1024,
        ),
    )(nzk, cnt, adj, x, w, b)


def gin_forward(x, edge_index, w1, b1, w2, b2, *, eps=0.0):
    """GIN forward. x: [N, F_in] f32; edge_index: [2, E] int32
    (row 0 = source, row 1 = target); weights stored transposed as
    [F_in, F_out] so each layer computes x @ W + b.  `eps` is static."""
    n, f_in = x.shape
    f_hid = w1.shape[1]
    f_out = w2.shape[1]

    # 256-aligned aggregation tiles feed the v6e/v7x 2x256^2 MXU; grow to 512
    # only once there are >=2 row tiles (keeps both v7x TensorCores busy).
    tile = 512 if n >= 1024 else 256
    n_pad = _round_up(n, tile)
    nt = n_pad // tile
    fi_pad = _round_up(f_in, 128)
    fh_pad = _round_up(f_hid, 128)
    fo_pad = _round_up(f_out, 128)

    src, dst = edge_index[0], edge_index[1]

    # Dense adjacency: single O(E) scatter straight into bf16 (edge
    # multiplicities <= 256 stay exact).  No jnp.eye, no N^2 cast pass.
    adj = jnp.zeros((n_pad, n_pad), jnp.bfloat16).at[dst, src].add(
        jnp.ones_like(src, dtype=jnp.bfloat16))

    # Per-row-tile compacted nonzero k-tile lists (O(E)).  Diagonal tiles are
    # always included (the in-kernel self term lives there).  Padding entries
    # repeat the last valid index so their HBM->VMEM DMAs are elided.
    occ = jnp.zeros((nt, nt), jnp.int32).at[dst // tile, src // tile].add(1)
    occ = occ.at[jnp.arange(nt), jnp.arange(nt)].add(1)
    nonzero = occ > 0
    cnt = nonzero.sum(axis=1).astype(jnp.int32)            # >= 1 per row tile
    col = jnp.arange(nt, dtype=jnp.int32)
    keys = jnp.where(nonzero, col[None, :], nt)             # sentinel = nt
    sorted_k = jnp.sort(keys, axis=1)
    last_valid = sorted_k[jnp.arange(nt), cnt - 1]
    nzk = jnp.where(sorted_k >= nt, last_valid[:, None], sorted_k)
    nzk = nzk.astype(jnp.int32)
    # TODO(synk): for large sparse graphs, thread a static max-nnz-per-row-tile
    # bound in as a Python int so the k grid extent shrinks below nt.

    # Pad operands: bf16 inputs/weights, f32 biases (f32 accumulation in-kernel).
    x_p = jnp.zeros((n_pad, fi_pad), jnp.bfloat16).at[:n, :f_in].set(
        x.astype(jnp.bfloat16))
    w1_p = jnp.zeros((fi_pad, fh_pad), jnp.bfloat16).at[:f_in, :f_hid].set(
        w1.astype(jnp.bfloat16))
    b1_p = jnp.zeros((1, fh_pad), jnp.float32).at[0, :f_hid].set(b1)
    w2_p = jnp.zeros((fh_pad, fo_pad), jnp.bfloat16).at[:f_hid, :f_out].set(
        w2.astype(jnp.bfloat16))
    b2_p = jnp.zeros((1, fo_pad), jnp.float32).at[0, :f_out].set(b2)

    # Layer 1: fused projection + aggregation + bias + ReLU; h stays bf16.
    h = _gin_layer(adj, x_p, w1_p, b1_p, nzk, cnt, eps=eps, relu=True,
                   out_dtype=jnp.bfloat16, tile=tile)
    # Layer 2: same fused kernel, f32 output (only f_out of 128 lanes are real).
    y = _gin_layer(adj, h, w2_p, b2_p, nzk, cnt, eps=eps, relu=False,
                   out_dtype=jnp.float32, tile=tile)
    return y[:n, :f_out]


def gin_reference(x, edge_index, w1, b1, w2, b2, eps=0.0):
    """Pure-JAX f32 reference matching the PyTorch module."""
    n = x.shape[0]
    src, dst = edge_index[0], edge_index[1]
    adj = jnp.zeros((n, n), jnp.float32).at[dst, src].add(1.0)
    x1 = ((1.0 + eps) * x + adj @ x) @ w1 + b1
    h = jax.nn.relu(x1)
    x2 = ((1.0 + eps) * h + adj @ h) @ w2 + b2
    return x2


if __name__ == "__main__":
    # Small GIN: N=200 nodes, E=600 edges, in_dim=16, hidden_dim=32, out_dim=8.
    n, e = 200, 600
    in_dim, hidden_dim, out_dim = 16, 32, 8

    key = jax.random.PRNGKey(0)
    kx, ks, kd, kw1, kb1, kw2, kb2 = jax.random.split(key, 7)

    x = jax.random.normal(kx, (n, in_dim), jnp.float32)
    src = jax.random.randint(ks, (e,), 0, n, dtype=jnp.int32)
    dst = jax.random.randint(kd, (e,), 0, n, dtype=jnp.int32)
    edge_index = jnp.stack([src, dst])

    # torch.nn.Linear-style init (weights already transposed to [F_in, F_out]).
    s1 = 1.0 / (in_dim ** 0.5)
    s2 = 1.0 / (hidden_dim ** 0.5)
    w1 = jax.random.uniform(kw1, (in_dim, hidden_dim), jnp.float32, -s1, s1)
    b1 = jax.random.uniform(kb1, (hidden_dim,), jnp.float32, -s1, s1)
    w2 = jax.random.uniform(kw2, (hidden_dim, out_dim), jnp.float32, -s2, s2)
    b2 = jax.random.uniform(kb2, (out_dim,), jnp.float32, -s2, s2)

    gin = jax.jit(gin_forward)
    out = jax.block_until_ready(gin(x, edge_index, w1, b1, w2, b2))

    ref = gin_reference(x, edge_index, w1, b1, w2, b2)
    err = float(jnp.max(jnp.abs(out - ref) / (jnp.abs(ref) + 1.0)))
    assert out.shape == (n, out_dim)
    assert err < 0.08, f"max relative error too large: {err}"
    print("KERNEL_OK")
</pallas_src>

<mosaic_0001>
module attributes {stable_mosaic.version = 11 : i64} {
  func.func private @main(%arg0: i32) attributes {dimension_semantics = [#tpu.dimension_semantics<core_parallel>], iteration_bounds = array<i64: 2>, tpu.core_type = #tpu.core_type<sc_scalar_subcore>, window_params = []} {
    return
  }
}

module attributes {stable_mosaic.version = 11 : i64} {
  func.func private @main(%arg0: i32) attributes {dimension_semantics = [#tpu.dimension_semantics<core_parallel>], iteration_bounds = array<i64: 2>, tpu.core_type = #tpu.core_type<sc_scalar_subcore>, window_params = []} {
    return
  }
}

module attributes {stable_mosaic.version = 11 : i64} {
  func.func @kernel(%arg0: i32, %arg1: i32, %arg2: memref<1x1xi32, #tpu.memory_space<smem>>, %arg3: memref<1xi32, #tpu.memory_space<smem>>, %arg4: memref<256x256xbf16, #tpu.memory_space<vmem>>, %arg5: memref<256x128xbf16, #tpu.memory_space<vmem>>, %arg6: memref<128x128xbf16, #tpu.memory_space<vmem>>, %arg7: memref<1x128xf32, #tpu.memory_space<vmem>>, %arg8: memref<256x128xbf16, #tpu.memory_space<vmem>>, %arg9: memref<256x128xf32, #tpu.memory_space<vmem>>) attributes {dimension_semantics = [#tpu.dimension_semantics<parallel>, #tpu.dimension_semantics<arbitrary>], iteration_bounds = array<i64: 1, 1>, scalar_prefetch = 2 : i64, scratch_operands = 1 : i64, tpu.core_type = #tpu.core_type<tc>, window_params = [{transform_indices = @transform_0, window_bounds = array<i64: 256, 256>}, {transform_indices = @transform_1, window_bounds = array<i64: 256, 128>}, {pipeline_mode = #tpu.pipeline_mode<synchronous>, transform_indices = @transform_2, window_bounds = array<i64: 128, 128>}, {pipeline_mode = #tpu.pipeline_mode<synchronous>, transform_indices = @transform_3, window_bounds = array<i64: 1, 128>}, {transform_indices = @transform_4, window_bounds = array<i64: 256, 128>}]} {
    %c0_i32 = arith.constant 0 : i32
    %0 = arith.cmpi eq, %arg1, %c0_i32 : i32
    %1 = arith.extui %0 : i1 to i32
    %c0_i32_0 = arith.constant 0 : i32
    %2 = arith.cmpi ne, %1, %c0_i32_0 : i32
    scf.if %2 {
      %cst = arith.constant 0.000000e+00 : f32
      %11 = vector.broadcast %cst : f32 to vector<256x128xf32>
      %c0 = arith.constant 0 : index
      %c0_4 = arith.constant 0 : index
      %12 = vector.load %arg9[%c0, %c0_4] : memref<256x128xf32, #tpu.memory_space<vmem>>, vector<256x128xf32>
      tpu.vector_store %arg9[%c0, %c0_4], %11 {strides = array<i32>} : memref<256x128xf32, #tpu.memory_space<vmem>>, vector<256x128xf32>,
    } else {
    }
    %3 = arith.index_cast %arg0 : i32 to index
    %4 = memref.load %arg3[%3] : memref<1xi32, #tpu.memory_space<smem>>
    %5 = arith.cmpi slt, %arg1, %4 : i32
    %6 = arith.extui %5 : i1 to i32
    %c0_i32_1 = arith.constant 0 : i32
    %7 = arith.cmpi ne, %6, %c0_i32_1 : i32
    scf.if %7 {
      %c0 = arith.constant 0 : index
      %c0_4 = arith.constant 0 : index
      %11 = vector.load %arg5[%c0, %c0_4] : memref<256x128xbf16, #tpu.memory_space<vmem>>, vector<256x128xbf16>
      %c0_5 = arith.constant 0 : index
      %c0_6 = arith.constant 0 : index
      %12 = vector.load %arg6[%c0_5, %c0_6] : memref<128x128xbf16, #tpu.memory_space<vmem>>, vector<128x128xbf16>
      %cst = arith.constant dense<0.000000e+00> : vector<256x128xf32>
      %13 = tpu.matmul %11, %12, %cst {dimension_numbers = #tpu.dot_dimension_numbers<[1], [0], [0], [1], [0, 0, 1, 1], [], []>} : vector<256x128xbf16>, vector<128x128xbf16>, vector<256x128xf32> -> vector<256x128xf32>
      %c0_7 = arith.constant 0 : index
      %c0_8 = arith.constant 0 : index
      %14 = vector.load %arg4[%c0_7, %c0_8] : memref<256x256xbf16, #tpu.memory_space<vmem>>, vector<256x256xbf16>
      %15 = arith.truncf %13 : vector<256x128xf32> to vector<256x128xbf16>
      %cst_9 = arith.constant dense<0.000000e+00> : vector<256x128xf32>
      %16 = tpu.matmul %14, %15, %cst_9 {dimension_numbers = #tpu.dot_dimension_numbers<[1], [0], [0], [1], [0, 0, 1, 1], [], []>} : vector<256x256xbf16>, vector<256x128xbf16>, vector<256x128xf32> -> vector<256x128xf32>
      %17 = arith.index_cast %arg0 : i32 to index
      %18 = arith.index_cast %arg1 : i32 to index
      %19 = memref.load %arg2[%17, %18] : memref<1x1xi32, #tpu.memory_space<smem>>
      %20 = arith.cmpi eq, %19, %arg0 : i32
      %cst_10 = arith.constant 1.000000e+00 : f32
      %cst_11 = arith.constant 0.000000e+00 : f32
      %21 = arith.select %20, %cst_10, %cst_11 : f32
      %c0_12 = arith.constant 0 : index
      %c0_13 = arith.constant 0 : index
      %22 = vector.load %arg9[%c0_12, %c0_13] : memref<256x128xf32, #tpu.memory_space<vmem>>, vector<256x128xf32>
      %23 = vector.broadcast %21 : f32 to vector<256x128xf32>
      %24 = arith.mulf %23, %13 : vector<256x128xf32>
      %25 = arith.addf %16, %24 : vector<256x128xf32>
      %26 = arith.addf %22, %25 : vector<256x128xf32>
      %c0_14 = arith.constant 0 : index
      %c0_15 = arith.constant 0 : index
      %27 = vector.load %arg9[%c0_14, %c0_15] : memref<256x128xf32, #tpu.memory_space<vmem>>, vector<256x128xf32>
      tpu.vector_store %arg9[%c0_14, %c0_15], %26 {strides = array<i32>} : memref<256x128xf32, #tpu.memory_space<vmem>>, vector<256x128xf32>,
    } else {
    }
    %c0_i32_2 = arith.constant 0 : i32
    %8 = arith.cmpi eq, %arg1, %c0_i32_2 : i32
    %9 = arith.extui %8 : i1 to i32
    %c0_i32_3 = arith.constant 0 : i32
    %10 = arith.cmpi ne, %9, %c0_i32_3 : i32
    scf.if %10 {
      %c0 = arith.constant 0 : index
      %c0_4 = arith.constant 0 : index
      %11 = vector.load %arg9[%c0, %c0_4] : memref<256x128xf32, #tpu.memory_space<vmem>>, vector<256x128xf32>
      %c0_5 = arith.constant 0 : index
      %c0_6 = arith.constant 0 : index
      %12 = vector.load %arg7[%c0_5, %c0_6] : memref<1x128xf32, #tpu.memory_space<vmem>>, vector<1x128xf32>
      %13 = vector.broadcast %12 : vector<1x128xf32> to vector<256x128xf32>
      %14 = arith.addf %11, %13 : vector<256x128xf32>
      %cst = arith.constant 0.000000e+00 : f32
      %15 = vector.broadcast %cst : f32 to vector<256x128xf32>
      %16 = arith.maximumf %14, %15 : vector<256x128xf32>
      %17 = arith.truncf %16 : vector<256x128xf32> to vector<256x128xbf16>
      %c0_7 = arith.constant 0 : index
      %c0_8 = arith.constant 0 : index
      %18 = vector.load %arg8[%c0_7, %c0_8] : memref<256x128xbf16, #tpu.memory_space<vmem>>, vector<256x128xbf16>
      tpu.vector_store %arg8[%c0_7, %c0_8], %17 {strides = array<i32>} : memref<256x128xbf16, #tpu.memory_space<vmem>>, vector<256x128xbf16>,
    } else {
    }
    return
  }
  func.func @transform_0(%arg0: i32, %arg1: i32, %arg2: memref<1x1xi32, #tpu.memory_space<smem>>, %arg3: memref<1xi32, #tpu.memory_space<smem>>) -> (i32, i32) {
    %0 = arith.index_cast %arg0 : i32 to index
    %1 = arith.index_cast %arg1 : i32 to index
    %2 = memref.load %arg2[%0, %1] : memref<1x1xi32, #tpu.memory_space<smem>>
    %c0_i32 = arith.constant 0 : i32
    return %arg0, %2 : i32, i32
  }
  func.func @transform_1(%arg0: i32, %arg1: i32, %arg2: memref<1x1xi32, #tpu.memory_space<smem>>, %arg3: memref<1xi32, #tpu.memory_space<smem>>) -> (i32, i32) {
    %0 = arith.index_cast %arg0 : i32 to index
    %1 = arith.index_cast %arg1 : i32 to index
    %2 = memref.load %arg2[%0, %1] : memref<1x1xi32, #tpu.memory_space<smem>>
    %c0_i32 = arith.constant 0 : i32
    %c0_i32_0 = arith.constant 0 : i32
    return %2, %c0_i32 : i32, i32
  }
  func.func @transform_2(%arg0: i32, %arg1: i32, %arg2: memref<1x1xi32, #tpu.memory_space<smem>>, %arg3: memref<1xi32, #tpu.memory_space<smem>>) -> (i32, i32) {
    %c0_i32 = arith.constant 0 : i32
    %c0_i32_0 = arith.constant 0 : i32
    %c0_i32_1 = arith.constant 0 : i32
    return %c0_i32, %c0_i32_0 : i32, i32
  }
  func.func @transform_3(%arg0: i32, %arg1: i32, %arg2: memref<1x1xi32, #tpu.memory_space<smem>>, %arg3: memref<1xi32, #tpu.memory_space<smem>>) -> (i32, i32) {
    %c0_i32 = arith.constant 0 : i32
    %c0_i32_0 = arith.constant 0 : i32
    %c0_i32_1 = arith.constant 0 : i32
    return %c0_i32, %c0_i32_0 : i32, i32
  }
  func.func @transform_4(%arg0: i32, %arg1: i32, %arg2: memref<1x1xi32, #tpu.memory_space<smem>>, %arg3: memref<1xi32, #tpu.memory_space<smem>>) -> (i32, i32) {
    %c0_i32 = arith.constant 0 : i32
    %c0_i32_0 = arith.constant 0 : i32
    return %arg0, %c0_i32 : i32, i32
  }
}

module attributes {stable_mosaic.version = 11 : i64} {
  func.func @kernel(%arg0: i32, %arg1: i32, %arg2: memref<1x1xi32, #tpu.memory_space<smem>>, %arg3: memref<1xi32, #tpu.memory_space<smem>>, %arg4: memref<256x256xbf16, #tpu.memory_space<vmem>>, %arg5: memref<256x128xbf16, #tpu.memory_space<vmem>>, %arg6: memref<128x128xbf16, #tpu.memory_space<vmem>>, %arg7: memref<1x128xf32, #tpu.memory_space<vmem>>, %arg8: memref<256x128xf32, #tpu.memory_space<vmem>>, %arg9: memref<256x128xf32, #tpu.memory_space<vmem>>) attributes {dimension_semantics = [#tpu.dimension_semantics<parallel>, #tpu.dimension_semantics<arbitrary>], iteration_bounds = array<i64: 1, 1>, scalar_prefetch = 2 : i64, scratch_operands = 1 : i64, tpu.core_type = #tpu.core_type<tc>, window_params = [{transform_indices = @transform_0, window_bounds = array<i64: 256, 256>}, {transform_indices = @transform_1, window_bounds = array<i64: 256, 128>}, {pipeline_mode = #tpu.pipeline_mode<synchronous>, transform_indices = @transform_2, window_bounds = array<i64: 128, 128>}, {pipeline_mode = #tpu.pipeline_mode<synchronous>, transform_indices = @transform_3, window_bounds = array<i64: 1, 128>}, {transform_indices = @transform_4, window_bounds = array<i64: 256, 128>}]} {
    %c0_i32 = arith.constant 0 : i32
    %0 = arith.cmpi eq, %arg1, %c0_i32 : i32
    %1 = arith.extui %0 : i1 to i32
    %c0_i32_0 = arith.constant 0 : i32
    %2 = arith.cmpi ne, %1, %c0_i32_0 : i32
    scf.if %2 {
      %cst = arith.constant 0.000000e+00 : f32
      %11 = vector.broadcast %cst : f32 to vector<256x128xf32>
      %c0 = arith.constant 0 : index
      %c0_4 = arith.constant 0 : index
      %12 = vector.load %arg9[%c0, %c0_4] : memref<256x128xf32, #tpu.memory_space<vmem>>, vector<256x128xf32>
      tpu.vector_store %arg9[%c0, %c0_4], %11 {strides = array<i32>} : memref<256x128xf32, #tpu.memory_space<vmem>>, vector<256x128xf32>,
    } else {
    }
    %3 = arith.index_cast %arg0 : i32 to index
    %4 = memref.load %arg3[%3] : memref<1xi32, #tpu.memory_space<smem>>
    %5 = arith.cmpi slt, %arg1, %4 : i32
    %6 = arith.extui %5 : i1 to i32
    %c0_i32_1 = arith.constant 0 : i32
    %7 = arith.cmpi ne, %6, %c0_i32_1 : i32
    scf.if %7 {
      %c0 = arith.constant 0 : index
      %c0_4 = arith.constant 0 : index
      %11 = vector.load %arg5[%c0, %c0_4] : memref<256x128xbf16, #tpu.memory_space<vmem>>, vector<256x128xbf16>
      %c0_5 = arith.constant 0 : index
      %c0_6 = arith.constant 0 : index
      %12 = vector.load %arg6[%c0_5, %c0_6] : memref<128x128xbf16, #tpu.memory_space<vmem>>, vector<128x128xbf16>
      %cst = arith.constant dense<0.000000e+00> : vector<256x128xf32>
      %13 = tpu.matmul %11, %12, %cst {dimension_numbers = #tpu.dot_dimension_numbers<[1], [0], [0], [1], [0, 0, 1, 1], [], []>} : vector<256x128xbf16>, vector<128x128xbf16>, vector<256x128xf32> -> vector<256x128xf32>
      %c0_7 = arith.constant 0 : index
      %c0_8 = arith.constant 0 : index
      %14 = vector.load %arg4[%c0_7, %c0_8] : memref<256x256xbf16, #tpu.memory_space<vmem>>, vector<256x256xbf16>
      %15 = arith.truncf %13 : vector<256x128xf32> to vector<256x128xbf16>
      %cst_9 = arith.constant dense<0.000000e+00> : vector<256x128xf32>
      %16 = tpu.matmul %14, %15, %cst_9 {dimension_numbers = #tpu.dot_dimension_numbers<[1], [0], [0], [1], [0, 0, 1, 1], [], []>} : vector<256x256xbf16>, vector<256x128xbf16>, vector<256x128xf32> -> vector<256x128xf32>
      %17 = arith.index_cast %arg0 : i32 to index
      %18 = arith.index_cast %arg1 : i32 to index
      %19 = memref.load %arg2[%17, %18] : memref<1x1xi32, #tpu.memory_space<smem>>
      %20 = arith.cmpi eq, %19, %arg0 : i32
      %cst_10 = arith.constant 1.000000e+00 : f32
      %cst_11 = arith.constant 0.000000e+00 : f32
      %21 = arith.select %20, %cst_10, %cst_11 : f32
      %c0_12 = arith.constant 0 : index
      %c0_13 = arith.constant 0 : index
      %22 = vector.load %arg9[%c0_12, %c0_13] : memref<256x128xf32, #tpu.memory_space<vmem>>, vector<256x128xf32>
      %23 = vector.broadcast %21 : f32 to vector<256x128xf32>
      %24 = arith.mulf %23, %13 : vector<256x128xf32>
      %25 = arith.addf %16, %24 : vector<256x128xf32>
      %26 = arith.addf %22, %25 : vector<256x128xf32>
      %c0_14 = arith.constant 0 : index
      %c0_15 = arith.constant 0 : index
      %27 = vector.load %arg9[%c0_14, %c0_15] : memref<256x128xf32, #tpu.memory_space<vmem>>, vector<256x128xf32>
      tpu.vector_store %arg9[%c0_14, %c0_15], %26 {strides = array<i32>} : memref<256x128xf32, #tpu.memory_space<vmem>>, vector<256x128xf32>,
    } else {
    }
    %c0_i32_2 = arith.constant 0 : i32
    %8 = arith.cmpi eq, %arg1, %c0_i32_2 : i32
    %9 = arith.extui %8 : i1 to i32
    %c0_i32_3 = arith.constant 0 : i32
    %10 = arith.cmpi ne, %9, %c0_i32_3 : i32
    scf.if %10 {
      %c0 = arith.constant 0 : index
      %c0_4 = arith.constant 0 : index
      %11 = vector.load %arg9[%c0, %c0_4] : memref<256x128xf32, #tpu.memory_space<vmem>>, vector<256x128xf32>
      %c0_5 = arith.constant 0 : index
      %c0_6 = arith.constant 0 : index
      %12 = vector.load %arg7[%c0_5, %c0_6] : memref<1x128xf32, #tpu.memory_space<vmem>>, vector<1x128xf32>
      %13 = vector.broadcast %12 : vector<1x128xf32> to vector<256x128xf32>
      %14 = arith.addf %11, %13 : vector<256x128xf32>
      %c0_7 = arith.constant 0 : index
      %c0_8 = arith.constant 0 : index
      %15 = vector.load %arg8[%c0_7, %c0_8] : memref<256x128xf32, #tpu.memory_space<vmem>>, vector<256x128xf32>
      tpu.vector_store %arg8[%c0_7, %c0_8], %14 {strides = array<i32>} : memref<256x128xf32, #tpu.memory_space<vmem>>, vector<256x128xf32>,
    } else {
    }
    return
  }
  func.func @transform_0(%arg0: i32, %arg1: i32, %arg2: memref<1x1xi32, #tpu.memory_space<smem>>, %arg3: memref<1xi32, #tpu.memory_space<smem>>) -> (i32, i32) {
    %0 = arith.index_cast %arg0 : i32 to index
    %1 = arith.index_cast %arg1 : i32 to index
    %2 = memref.load %arg2[%0, %1] : memref<1x1xi32, #tpu.memory_space<smem>>
    %c0_i32 = arith.constant 0 : i32
    return %arg0, %2 : i32, i32
  }
  func.func @transform_1(%arg0: i32, %arg1: i32, %arg2: memref<1x1xi32, #tpu.memory_space<smem>>, %arg3: memref<1xi32, #tpu.memory_space<smem>>) -> (i32, i32) {
    %0 = arith.index_cast %arg0 : i32 to index
    %1 = arith.index_cast %arg1 : i32 to index
    %2 = memref.load %arg2[%0, %1] : memref<1x1xi32, #tpu.memory_space<smem>>
    %c0_i32 = arith.constant 0 : i32
    %c0_i32_0 = arith.constant 0 : i32
    return %2, %c0_i32 : i32, i32
  }
  func.func @transform_2(%arg0: i32, %arg1: i32, %arg2: memref<1x1xi32, #tpu.memory_space<smem>>, %arg3: memref<1xi32, #tpu.memory_space<smem>>) -> (i32, i32) {
    %c0_i32 = arith.constant 0 : i32
    %c0_i32_0 = arith.constant 0 : i32
    %c0_i32_1 = arith.constant 0 : i32
    return %c0_i32, %c0_i32_0 : i32, i32
  }
  func.func @transform_3(%arg0: i32, %arg1: i32, %arg2: memref<1x1xi32, #tpu.memory_space<smem>>, %arg3: memref<1xi32, #tpu.memory_space<smem>>) -> (i32, i32) {
    %c0_i32 = arith.constant 0 : i32
    %c0_i32_0 = arith.constant 0 : i32
    %c0_i32_1 = arith.constant 0 : i32
    return %c0_i32, %c0_i32_0 : i32, i32
  }
  func.func @transform_4(%arg0: i32, %arg1: i32, %arg2: memref<1x1xi32, #tpu.memory_space<smem>>, %arg3: memref<1xi32, #tpu.memory_space<smem>>) -> (i32, i32) {
    %c0_i32 = arith.constant 0 : i32
    %c0_i32_0 = arith.constant 0 : i32
    return %arg0, %c0_i32 : i32, i32
  }
}

</mosaic_0001>

<llo_original>
// kernel: gin_forward.3
$region0: #{gin_forward.3}
  #allocation0 [shape = 'u32[]', space=smem, size = 0x4, offset = 0x4, fixed_abs, tag = 'smem constant byte address 0x4 - core index']
  #allocation1 [shape = 'u32[144,128]{1,0:T(1,128)}', space=vmem, size = 0x12000, scoped, tag = 'internal scratch']
  #allocation2 [shape = 'f32[256,128]{1,0:T(8,128)}', space=vmem, size = 0x20000, scoped, tag = 'scratch operand']
  #allocation3 [shape = 's32[1]{0}', space=sflag, size = 0x4, scoped, tag = 'scoped memory for gin_forward.3']
  #allocation4 [shape = 's32[1,1]{1,0:T(1,128)S(6)}', space=smem, size = 0x200, scoped, tag = 'prefetched SMEM operand 0']
  #allocation5 [shape = 's32[1]{0:T(128)S(6)}', space=smem, size = 0x200, scoped, tag = 'prefetched SMEM operand 1']
  %s0 = inlined_call_operand.<no memory space> [shape: s32[1,1], index: 0, kind: input, shape index: {}]
  %s1 = inlined_call_operand.<no memory space> [shape: s32[1], index: 1, kind: input, shape index: {}]
  %s2 = inlined_call_operand.vmem [shape: bf16[256,256], index: 2, kind: input, shape index: {}]
  %s3 = inlined_call_operand.vmem [shape: bf16[256,128], index: 3, kind: input, shape index: {}]
  %s4 = inlined_call_operand.vmem [shape: bf16[128,128], index: 4, kind: input, shape index: {}]
  %s5 = inlined_call_operand.vmem [shape: f32[1,128], index: 5, kind: input, shape index: {}]
  %s6 = inlined_call_operand.vmem [shape: f32[256,128], index: 6, kind: output, shape index: {}]
  %s7 = sld [smem:[#allocation0]]
  $region38: #{gin_forward.3} parent=0
    _
  %s9 = ssub.s32 1, %s7
  %s10 = scalar_select 0, %s9, %s7
  %11 = sst [smem:[#allocation4]] %s0
  %12 = sst [smem:[#allocation5]] %s1
  // Predicated region
  $region2: #{gin_forward.3} parent=0 // pred_check
    _
  $region3: #{gin_forward.3} parent=0 // pred_check_branch
    %14 = sbr.rel (0) target = $region5
  $region4: #{gin_forward.3} parent=0 // pred_region
    %s15 = sadd.s32 0, 0
    %s16 = smul.u32 %s15, 128
    %s17 = sadd.s32 %s16, 0
    %s18 = sld [smem:[#allocation4 + %s17]]
    %s19 = smul.u32 2, %s18
    %p20 = scmp.lt.s32.totalorder %s19, 1
    %s21 = scalar_select %p20, %s19, 1
    %s22 = smul.addr %s21, 4
    %s23 = scalar_lea.vmem %s2, %s22
    %s24 = sadd.s32 0, 0
    %s25 = smul.u32 %s24, 128
    %s26 = sadd.s32 %s25, 0
    %s27 = sld [smem:[#allocation4 + %s26]]
    %s28 = smul.u32 2, %s27
  $region5: #{gin_forward.3} parent=0 // pred_fallthru
    _
  // Predicated region
  $region6: #{gin_forward.3} parent=0 // pred_check
    _
  $region7: #{gin_forward.3} parent=0 // pred_check_branch
    %30 = sbr.rel (0) target = $region9
  $region8: #{gin_forward.3} parent=0 // pred_region
    %s31 = sadd.s32 0, 0
    %s32 = smul.u32 %s31, 128
    %s33 = sadd.s32 %s32, 0
    %s34 = sld [smem:[#allocation4 + %s33]]
    %s35 = smul.u32 32, %s34
    %p36 = scmp.lt.s32.totalorder %s35, 31
    %s37 = scalar_select %p36, %s35, 31
    %s38 = smul.addr %s37, 4
    %s39 = scalar_lea.vmem %s3, %s38
    %s40 = sadd.s32 0, 0
    %s41 = smul.u32 %s40, 128
    %s42 = sadd.s32 %s41, 0
    %s43 = sld [smem:[#allocation4 + %s42]]
    %s44 = smul.u32 32, %s43
  $region9: #{gin_forward.3} parent=0 // pred_fallthru
    _
  // Predicated region
  $region10: #{gin_forward.3} parent=0 // pred_check
    _
  $region11: #{gin_forward.3} parent=0 // pred_check_branch
    %46 = sbr.rel (0) target = $region13
  $region12: #{gin_forward.3} parent=0 // pred_region
    _
  $region13: #{gin_forward.3} parent=0 // pred_fallthru
    _
  // Predicated region
  $region14: #{gin_forward.3} parent=0 // pred_check
    _
  $region15: #{gin_forward.3} parent=0 // pred_check_branch
    %48 = sbr.rel (0) target = $region17
  $region16: #{gin_forward.3} parent=0 // pred_region
    _
  $region17: #{gin_forward.3} parent=0 // pred_fallthru
    _
  %s49 = sadd.s32 0, 0
  %s50 = smul.u32 %s49, 128
  %s51 = sadd.s32 %s50, 0
  %s52 = sld [smem:[#allocation4 + %s51]]
  %s53 = smul.u32 2, %s52
  %p54 = scmp.lt.s32.totalorder %s53, 1
  %s55 = scalar_select %p54, %s53, 1
  %s56 = smul.addr %s55, 4
  %s57 = scalar_lea.vmem %s2, %s56
  %s58 = sadd.s32 0, 0
  %s59 = smul.u32 %s58, 128
  %s60 = sadd.s32 %s59, 0
  %s61 = sld [smem:[#allocation4 + %s60]]
  %s62 = smul.u32 32, %s61
  %p63 = scmp.lt.s32.totalorder %s62, 31
  %s64 = scalar_select %p63, %s62, 31
  %s65 = smul.addr %s64, 4
  %s66 = scalar_lea.vmem %s3, %s65
  %s67 = sadd.s32 0, 0
  %s68 = smul.u32 %s67, 128
  %s69 = sadd.s32 %s68, 0
  %s70 = sld [smem:[#allocation4 + %s69]]
  %s71 = smul.u32 2, %s70
  %p72 = scmp.lt.s32.totalorder %s71, 1
  %s73 = scalar_select %p72, %s71, 1
  %s74 = smul.addr %s73, 4
  %s75 = scalar_lea.vmem %s2, %s74
  %s76 = sadd.s32 0, 0
  %s77 = smul.u32 %s76, 128
  %s78 = sadd.s32 %s77, 0
  %s79 = sld [smem:[#allocation4 + %s78]]
  %s80 = smul.u32 2, %s79
  %s81 = sadd.s32 0, 0
  %s82 = smul.u32 %s81, 128
  %s83 = sadd.s32 %s82, 0
  %s84 = sld [smem:[#allocation4 + %s83]]
  %s85 = smul.u32 32, %s84
  %p86 = scmp.lt.s32.totalorder %s85, 31
  %s87 = scalar_select %p86, %s85, 31
  %s88 = smul.addr %s87, 4
  %s89 = scalar_lea.vmem %s3, %s88
  %s90 = sadd.s32 0, 0
  %s91 = smul.u32 %s90, 128
  %s92 = sadd.s32 %s91, 0
  %s93 = sld [smem:[#allocation4 + %s92]]
  %s94 = smul.u32 32, %s93
  %p96 = scmp.eq.s32.totalorder 0, 0
  // Predicated region
  $region18: #{gin_forward.3} parent=0 // pred_check
    %p97 = pneg %p96
  $region19: #{gin_forward.3} parent=0 // pred_check_branch
    %99 = sbr.rel (%p97) target = $region21
  $region20: #{gin_forward.3} parent=0 // pred_region
    %100 = vst [vmem:[#allocation2] sm:$0xff] 0.0
    %101 = vst [vmem:[#allocation2 + $0x8] sm:$0xff] 0.0
    %102 = vst [vmem:[#allocation2 + $0x10] sm:$0xff] 0.0
    %103 = vst [vmem:[#allocation2 + $0x18] sm:$0xff] 0.0
    %104 = vst [vmem:[#allocation2 + $0x20] sm:$0xff] 0.0
    %105 = vst [vmem:[#allocation2 + $0x28] sm:$0xff] 0.0
    %106 = vst [vmem:[#allocation2 + $0x30] sm:$0xff] 0.0
    %107 = vst [vmem:[#allocation2 + $0x38] sm:$0xff] 0.0
    %108 = vst [vmem:[#allocation2 + $0x40] sm:$0xff] 0.0
    %109 = vst [vmem:[#allocation2 + $0x48] sm:$0xff] 0.0
    %110 = vst [vmem:[#allocation2 + $0x50] sm:$0xff] 0.0
    %111 = vst [vmem:[#allocation2 + $0x58] sm:$0xff] 0.0
    %112 = vst [vmem:[#allocation2 + $0x60] sm:$0xff] 0.0
    %113 = vst [vmem:[#allocation2 + $0x68] sm:$0xff] 0.0
    %114 = vst [vmem:[#allocation2 + $0x70] sm:$0xff] 0.0
    %115 = vst [vmem:[#allocation2 + $0x78] sm:$0xff] 0.0
    %116 = vst [vmem:[#allocation2 + $0x80] sm:$0xff] 0.0
    %117 = vst [vmem:[#allocation2 + $0x88] sm:$0xff] 0.0
    %118 = vst [vmem:[#allocation2 + $0x90] sm:$0xff] 0.0
    %119 = vst [vmem:[#allocation2 + $0x98] sm:$0xff] 0.0
    %120 = vst [vmem:[#allocation2 + $0xa0] sm:$0xff] 0.0
    %121 = vst [vmem:[#allocation2 + $0xa8] sm:$0xff] 0.0
    %122 = vst [vmem:[#allocation2 + $0xb0] sm:$0xff] 0.0
    %123 = vst [vmem:[#allocation2 + $0xb8] sm:$0xff] 0.0
    %124 = vst [vmem:[#allocation2 + $0xc0] sm:$0xff] 0.0
    %125 = vst [vmem:[#allocation2 + $0xc8] sm:$0xff] 0.0
    %126 = vst [vmem:[#allocation2 + $0xd0] sm:$0xff] 0.0
    %127 = vst [vmem:[#allocation2 + $0xd8] sm:$0xff] 0.0
    %128 = vst [vmem:[#allocation2 + $0xe0] sm:$0xff] 0.0
    %129 = vst [vmem:[#allocation2 + $0xe8] sm:$0xff] 0.0
    %130 = vst [vmem:[#allocation2 + $0xf0] sm:$0xff] 0.0
    %131 = vst [vmem:[#allocation2 + $0xf8] sm:$0xff] 0.0
  $region21: #{gin_forward.3} parent=0 // pred_fallthru
    _
  %s132 = sld [smem:[#allocation5]]
  %p133 = scmp.lt.s32.totalorder 0, %s132
  // Predicated region
  $region22: #{gin_forward.3} parent=0 // pred_check
    %p134 = pneg %p133
  $region23: #{gin_forward.3} parent=0 // pred_check_branch
    %136 = sbr.rel (%p134) target = $region25
  $region24: #{gin_forward.3} parent=0 // pred_region
    %v137 = vld [vmem:[%s89] sm:$0xf]
    %v138 = vld [vmem:[%s89 + $0x4] sm:$0xf]
    %v139 = vld [vmem:[%s89 + $0x8] sm:$0xf]
    %v140 = vld [vmem:[%s89 + $0xc] sm:$0xf]
    %v141 = vld [vmem:[%s89 + $0x10] sm:$0xf]
    %v142 = vld [vmem:[%s89 + $0x14] sm:$0xf]
    %v143 = vld [vmem:[%s89 + $0x18] sm:$0xf]
    %v144 = vld [vmem:[%s89 + $0x1c] sm:$0xf]
    %v145 = vld [vmem:[%s89 + $0x20] sm:$0xf]
    %v146 = vld [vmem:[%s89 + $0x24] sm:$0xf]
    %v147 = vld [vmem:[%s89 + $0x28] sm:$0xf]
    %v148 = vld [vmem:[%s89 + $0x2c] sm:$0xf]
    %v149 = vld [vmem:[%s89 + $0x30] sm:$0xf]
    %v150 = vld [vmem:[%s89 + $0x34] sm:$0xf]
    %v151 = vld [vmem:[%s89 + $0x38] sm:$0xf]
    %v152 = vld [vmem:[%s89 + $0x3c] sm:$0xf]
    %v153 = vld [vmem:[%s89 + $0x40] sm:$0xf]
    %v154 = vld [vmem:[%s89 + $0x44] sm:$0xf]
    %v155 = vld [vmem:[%s89 + $0x48] sm:$0xf]
    %v156 = vld [vmem:[%s89 + $0x4c] sm:$0xf]
    %v157 = vld [vmem:[%s89 + $0x50] sm:$0xf]
    %v158 = vld [vmem:[%s89 + $0x54] sm:$0xf]
    %v159 = vld [vmem:[%s89 + $0x58] sm:$0xf]
    %v160 = vld [vmem:[%s89 + $0x5c] sm:$0xf]
    %v161 = vld [vmem:[%s89 + $0x60] sm:$0xf]
    %v162 = vld [vmem:[%s89 + $0x64] sm:$0xf]
    %v163 = vld [vmem:[%s89 + $0x68] sm:$0xf]
    %v164 = vld [vmem:[%s89 + $0x6c] sm:$0xf]
    %v165 = vld [vmem:[%s89 + $0x70] sm:$0xf]
    %v166 = vld [vmem:[%s89 + $0x74] sm:$0xf]
    %v167 = vld [vmem:[%s89 + $0x78] sm:$0xf]
    %v168 = vld [vmem:[%s89 + $0x7c] sm:$0xf]
    %v169 = vld [vmem:[%s4] sm:$0xf]
    %v170 = vld [vmem:[%s4 + $0x4] sm:$0xf]
    %v171 = vld [vmem:[%s4 + $0x8] sm:$0xf]
    %v172 = vld [vmem:[%s4 + $0xc] sm:$0xf]
    %v173 = vld [vmem:[%s4 + $0x10] sm:$0xf]
    %v174 = vld [vmem:[%s4 + $0x14] sm:$0xf]
    %v175 = vld [vmem:[%s4 + $0x18] sm:$0xf]
    %v176 = vld [vmem:[%s4 + $0x1c] sm:$0xf]
    %v177 = vld [vmem:[%s4 + $0x20] sm:$0xf]
    %v178 = vld [vmem:[%s4 + $0x24] sm:$0xf]
    %v179 = vld [vmem:[%s4 + $0x28] sm:$0xf]
    %v180 = vld [vmem:[%s4 + $0x2c] sm:$0xf]
    %v181 = vld [vmem:[%s4 + $0x30] sm:$0xf]
    %v182 = vld [vmem:[%s4 + $0x34] sm:$0xf]
    %v183 = vld [vmem:[%s4 + $0x38] sm:$0xf]
    %v184 = vld [vmem:[%s4 + $0x3c] sm:$0xf]
    %v217 = vunpack.c.l.b16 %v137
    %v218 = vunpack.c.l.b16 %v138
    %v219 = vunpack.c.l.b16 %v139
    %v220 = vunpack.c.l.b16 %v140
    %v221 = vunpack.c.l.b16 %v141
    %v222 = vunpack.c.l.b16 %v142
    %v223 = vunpack.c.l.b16 %v143
    %v224 = vunpack.c.l.b16 %v144
    %v225 = vunpack.c.l.b16 %v145
    %v226 = vunpack.c.l.b16 %v146
    %v227 = vunpack.c.l.b16 %v147
    %v228 = vunpack.c.l.b16 %v148
    %v229 = vunpack.c.l.b16 %v149
    %v230 = vunpack.c.l.b16 %v150
    %v231 = vunpack.c.l.b16 %v151
    %v232 = vunpack.c.l.b16 %v152
    %v233 = vunpack.c.l.b16 %v153
    %v234 = vunpack.c.l.b16 %v154
    %v235 = vunpack.c.l.b16 %v155
    %v236 = vunpack.c.l.b16 %v156
    %v237 = vunpack.c.l.b16 %v157
    %v238 = vunpack.c.l.b16 %v158
    %v239 = vunpack.c.l.b16 %v159
    %v240 = vunpack.c.l.b16 %v160
    %v241 = vunpack.c.l.b16 %v161
    %v242 = vunpack.c.l.b16 %v162
    %v243 = vunpack.c.l.b16 %v163
    %v244 = vunpack.c.l.b16 %v164
    %v245 = vunpack.c.l.b16 %v165
    %v246 = vunpack.c.l.b16 %v166
    %v247 = vunpack.c.l.b16 %v167
    %v248 = vunpack.c.l.b16 %v168
    %v249 = vpack.c.b16 %v218, %v217
    %v250 = vpack.c.b16 %v220, %v219
    %v251 = vpack.c.b16 %v222, %v221
    %v252 = vpack.c.b16 %v224, %v223
    %v253 = vpack.c.b16 %v226, %v225
    %v254 = vpack.c.b16 %v228, %v227
    %v255 = vpack.c.b16 %v230, %v229
    %v256 = vpack.c.b16 %v232, %v231
    %v257 = vpack.c.b16 %v234, %v233
    %v258 = vpack.c.b16 %v236, %v235
    %v259 = vpack.c.b16 %v238, %v237
    %v260 = vpack.c.b16 %v240, %v239
    %v261 = vpack.c.b16 %v242, %v241
    %v262 = vpack.c.b16 %v244, %v243
    %v263 = vpack.c.b16 %v246, %v245
    %v264 = vpack.c.b16 %v248, %v247
    %v297 = vunpack.c.l.b16 %v169
    %v298 = vunpack.c.l.b16 %v170
    %v299 = vunpack.c.l.b16 %v171
    %v300 = vunpack.c.l.b16 %v172
    %v301 = vunpack.c.l.b16 %v173
    %v302 = vunpack.c.l.b16 %v174
    %v303 = vunpack.c.l.b16 %v175
    %v304 = vunpack.c.l.b16 %v176
    %v305 = vunpack.c.l.b16 %v177
    %v306 = vunpack.c.l.b16 %v178
    %v307 = vunpack.c.l.b16 %v179
    %v308 = vunpack.c.l.b16 %v180
    %v309 = vunpack.c.l.b16 %v181
    %v310 = vunpack.c.l.b16 %v182
    %v311 = vunpack.c.l.b16 %v183
    %v312 = vunpack.c.l.b16 %v184
    %v313 = vpack.c.b16 %v298, %v297
    %v314 = vpack.c.b16 %v300, %v299
    %v315 = vpack.c.b16 %v302, %v301
    %v316 = vpack.c.b16 %v304, %v303
    %v317 = vpack.c.b16 %v306, %v305
    %v318 = vpack.c.b16 %v308, %v307
    %v319 = vpack.c.b16 %v310, %v309
    %v320 = vpack.c.b16 %v312, %v311
    %329 = vmatprep.subr.bf16.mxu0 0
    %330 = vmatpush1.bf16.msra.mxu0 %v320
    %331 = vmatprep.subr.bf16.mxu0 0
    %332 = vmatpush1.bf16.msra.mxu0 %v319
    %333 = vmatprep.subr.bf16.mxu0 0
    %334 = vmatpush1.bf16.msra.mxu0 %v318
    %335 = vmatprep.subr.bf16.mxu0 0
    %336 = vmatpush1.bf16.msra.mxu0 %v317
    %337 = vmatprep.subr.bf16.mxu0 0
    %338 = vmatpush1.bf16.msra.mxu0 %v316
    %339 = vmatprep.subr.bf16.mxu0 0
    %340 = vmatpush1.bf16.msra.mxu0 %v315
    %341 = vmatprep.subr.bf16.mxu0 0
    %342 = vmatpush1.bf16.msra.mxu0 %v314
    %343 = vmatprep.subr.bf16.mxu0 0
    %344 = vmatpush1.bf16.msra.mxu0 %v313
    %345 = vmatprep.subr.bf16.mxu0 0
    %346 = vmatpush2.bf16.msra.mxu0 0
    %347 = vmatprep.subr.bf16.mxu0 0
    %348 = vmatpush2.bf16.msra.mxu0 0
    %349 = vmatprep.subr.bf16.mxu0 0
    %350 = vmatpush2.bf16.msra.mxu0 0
    %351 = vmatprep.subr.bf16.mxu0 0
    %352 = vmatpush2.bf16.msra.mxu0 0
    %353 = vmatprep.subr.bf16.mxu0 0
    %354 = vmatpush2.bf16.msra.mxu0 0
    %355 = vmatprep.subr.bf16.mxu0 0
    %356 = vmatpush2.bf16.msra.mxu0 0
    %357 = vmatprep.subr.bf16.mxu0 0
    %358 = vmatpush2.bf16.msra.mxu0 0
    %359 = vmatprep.subr.bf16.mxu0 0
    %360 = vmatpush2.bf16.msra.mxu0 0
    %361 = vmatprep.mubr.bf16.mxu0 0
    %362 = vmatmul.mubr.bf16.gmra.mxu0 %v249
    %v363 = vpop.f32.mrf.mxu0
    %v364 = vadd.f32 0.0, %v363
    %v365 = vpop.f32.mrf.mxu0
    %v366 = vpop.f32.mrf.mxu0
    %v367 = vadd.f32 0.0, %v366
    %v368 = vpop.f32.mrf.mxu0
    %369 = vmatprep.mubr.bf16.mxu0 0
    %370 = vmatmul.mubr.bf16.gmra.mxu0 %v250
    %v371 = vpop.f32.mrf.mxu0
    %v372 = vadd.f32 0.0, %v371
    %v373 = vpop.f32.mrf.mxu0
    %v374 = vpop.f32.mrf.mxu0
    %v375 = vadd.f32 0.0, %v374
    %v376 = vpop.f32.mrf.mxu0
    %377 = vmatprep.mubr.bf16.mxu0 0
    %378 = vmatmul.mubr.bf16.gmra.mxu0 %v251
    %v379 = vpop.f32.mrf.mxu0
    %v380 = vadd.f32 0.0, %v379
    %v381 = vpop.f32.mrf.mxu0
    %v382 = vpop.f32.mrf.mxu0
    %v383 = vadd.f32 0.0, %v382
    %v384 = vpop.f32.mrf.mxu0
    %385 = vmatprep.mubr.bf16.mxu0 0
    %386 = vmatmul.mubr.bf16.gmra.mxu0 %v252
    %v387 = vpop.f32.mrf.mxu0
    %v388 = vadd.f32 0.0, %v387
    %v389 = vpop.f32.mrf.mxu0
    %v390 = vpop.f32.mrf.mxu0
    %v391 = vadd.f32 0.0, %v390
    %v392 = vpop.f32.mrf.mxu0
    %393 = vmatprep.mubr.bf16.mxu0 0
    %394 = vmatmul.mubr.bf16.gmra.mxu0 %v253
    %v395 = vpop.f32.mrf.mxu0
    %v396 = vadd.f32 0.0, %v395
    %v397 = vpop.f32.mrf.mxu0
    %v398 = vpop.f32.mrf.mxu0
    %v399 = vadd.f32 0.0, %v398
    %v400 = vpop.f32.mrf.mxu0
    %401 = vmatprep.mubr.bf16.mxu0 0
    %402 = vmatmul.mubr.bf16.gmra.mxu0 %v254
    %v403 = vpop.f32.mrf.mxu0
    %v404 = vadd.f32 0.0, %v403
    %v405 = vpop.f32.mrf.mxu0
    %v406 = vpop.f32.mrf.mxu0
    %v407 = vadd.f32 0.0, %v406
    %v408 = vpop.f32.mrf.mxu0
    %409 = vmatprep.mubr.bf16.mxu0 0
    %410 = vmatmul.mubr.bf16.gmra.mxu0 %v255
    %v411 = vpop.f32.mrf.mxu0
    %v412 = vadd.f32 0.0, %v411
    %v413 = vpop.f32.mrf.mxu0
    %v414 = vpop.f32.mrf.mxu0
    %v415 = vadd.f32 0.0, %v414
    %v416 = vpop.f32.mrf.mxu0
    %417 = vmatprep.mubr.bf16.mxu0 0
    %418 = vmatmul.mubr.bf16.gmra.mxu0 %v256
    %v419 = vpop.f32.mrf.mxu0
    %v420 = vadd.f32 0.0, %v419
    %v421 = vpop.f32.mrf.mxu0
    %v422 = vpop.f32.mrf.mxu0
    %v423 = vadd.f32 0.0, %v422
    %v424 = vpop.f32.mrf.mxu0
    %425 = vmatprep.mubr.bf16.mxu0 0
    %426 = vmatmul.mubr.bf16.gmra.mxu0 %v257
    %v427 = vpop.f32.mrf.mxu0
    %v428 = vadd.f32 0.0, %v427
    %v429 = vpop.f32.mrf.mxu0
    %v430 = vpop.f32.mrf.mxu0
    %v431 = vadd.f32 0.0, %v430
    %v432 = vpop.f32.mrf.mxu0
    %433 = vmatprep.mubr.bf16.mxu0 0
    %434 = vmatmul.mubr.bf16.gmra.mxu0 %v258
    %v435 = vpop.f32.mrf.mxu0
    %v436 = vadd.f32 0.0, %v435
    %v437 = vpop.f32.mrf.mxu0
    %v438 = vpop.f32.mrf.mxu0
    %v439 = vadd.f32 0.0, %v438
    %v440 = vpop.f32.mrf.mxu0
    %441 = vmatprep.mubr.bf16.mxu0 0
    %442 = vmatmul.mubr.bf16.gmra.mxu0 %v259
    %v443 = vpop.f32.mrf.mxu0
    %v444 = vadd.f32 0.0, %v443
    %v445 = vpop.f32.mrf.mxu0
    %v446 = vpop.f32.mrf.mxu0
    %v447 = vadd.f32 0.0, %v446
    %v448 = vpop.f32.mrf.mxu0
    %449 = vmatprep.mubr.bf16.mxu0 0
    %450 = vmatmul.mubr.bf16.gmra.mxu0 %v260
    %v451 = vpop.f32.mrf.mxu0
    %v452 = vadd.f32 0.0, %v451
    %v453 = vpop.f32.mrf.mxu0
    %v454 = vpop.f32.mrf.mxu0
    %v455 = vadd.f32 0.0, %v454
    %v456 = vpop.f32.mrf.mxu0
    %457 = vmatprep.mubr.bf16.mxu0 0
    %458 = vmatmul.mubr.bf16.gmra.mxu0 %v261
    %v459 = vpop.f32.mrf.mxu0
    %v460 = vadd.f32 0.0, %v459
    %v461 = vpop.f32.mrf.mxu0
    %v462 = vpop.f32.mrf.mxu0
    %v463 = vadd.f32 0.0, %v462
    %v464 = vpop.f32.mrf.mxu0
    %465 = vmatprep.mubr.bf16.mxu0 0
    %466 = vmatmul.mubr.bf16.gmra.mxu0 %v262
    %v467 = vpop.f32.mrf.mxu0
    %v468 = vadd.f32 0.0, %v467
    %v469 = vpop.f32.mrf.mxu0
    %v470 = vpop.f32.mrf.mxu0
    %v471 = vadd.f32 0.0, %v470
    %v472 = vpop.f32.mrf.mxu0
    %473 = vmatprep.mubr.bf16.mxu0 0
    %474 = vmatmul.mubr.bf16.gmra.mxu0 %v263
    %v475 = vpop.f32.mrf.mxu0
    %v476 = vadd.f32 0.0, %v475
    %v477 = vpop.f32.mrf.mxu0
    %v478 = vpop.f32.mrf.mxu0
    %v479 = vadd.f32 0.0, %v478
    %v480 = vpop.f32.mrf.mxu0
    %481 = vmatprep.mubr.bf16.mxu0 0
    %482 = vmatmul.mubr.bf16.gmra.mxu0 %v264
    %v483 = vpop.f32.mrf.mxu0
    %v484 = vadd.f32 0.0, %v483
    %v485 = vpop.f32.mrf.mxu0
    %v486 = vpop.f32.mrf.mxu0
    %v487 = vadd.f32 0.0, %v486
    %v488 = vpop.f32.mrf.mxu0
    %489 = vdwg.mxu0
    %v490 = vld [vmem:[%s75] sm:$0xff]
    %v491 = vld [vmem:[%s75 + $0x8] sm:$0xff]
    %v492 = vld [vmem:[%s75 + $0x10] sm:$0xff]
    %v493 = vld [vmem:[%s75 + $0x18] sm:$0xff]
    %v494 = vld [vmem:[%s75 + $0x20] sm:$0xff]
    %v495 = vld [vmem:[%s75 + $0x28] sm:$0xff]
    %v496 = vld [vmem:[%s75 + $0x30] sm:$0xff]
    %v497 = vld [vmem:[%s75 + $0x38] sm:$0xff]
    %v498 = vld [vmem:[%s75 + $0x40] sm:$0xff]
    %v499 = vld [vmem:[%s75 + $0x48] sm:$0xff]
    %v500 = vld [vmem:[%s75 + $0x50] sm:$0xff]
    %v501 = vld [vmem:[%s75 + $0x58] sm:$0xff]
    %v502 = vld [vmem:[%s75 + $0x60] sm:$0xff]
    %v503 = vld [vmem:[%s75 + $0x68] sm:$0xff]
    %v504 = vld [vmem:[%s75 + $0x70] sm:$0xff]
    %v505 = vld [vmem:[%s75 + $0x78] sm:$0xff]
    %v506 = vld [vmem:[%s75 + $0x80] sm:$0xff]
    %v507 = vld [vmem:[%s75 + $0x88] sm:$0xff]
    %v508 = vld [vmem:[%s75 + $0x90] sm:$0xff]
    %v509 = vld [vmem:[%s75 + $0x98] sm:$0xff]
    %v510 = vld [vmem:[%s75 + $0xa0] sm:$0xff]
    %v511 = vld [vmem:[%s75 + $0xa8] sm:$0xff]
    %v512 = vld [vmem:[%s75 + $0xb0] sm:$0xff]
    %v513 = vld [vmem:[%s75 + $0xb8] sm:$0xff]
    %v514 = vld [vmem:[%s75 + $0xc0] sm:$0xff]
    %v515 = vld [vmem:[%s75 + $0xc8] sm:$0xff]
    %v516 = vld [vmem:[%s75 + $0xd0] sm:$0xff]
    %v517 = vld [vmem:[%s75 + $0xd8] sm:$0xff]
    %v518 = vld [vmem:[%s75 + $0xe0] sm:$0xff]
    %v519 = vld [vmem:[%s75 + $0xe8] sm:$0xff]
    %v520 = vld [vmem:[%s75 + $0xf0] sm:$0xff]
    %v521 = vld [vmem:[%s75 + $0xf8] sm:$0xff]
    %v522 = vpack.c.bf16 %v367, %v364
    %v523 = vpack.c.bf16 %v375, %v372
    %v524 = vpack.c.bf16 %v383, %v380
    %v525 = vpack.c.bf16 %v391, %v388
    %v526 = vpack.c.bf16 %v399, %v396
    %v527 = vpack.c.bf16 %v407, %v404
    %v528 = vpack.c.bf16 %v415, %v412
    %v529 = vpack.c.bf16 %v423, %v420
    %v530 = vpack.c.bf16 %v431, %v428
    %v531 = vpack.c.bf16 %v439, %v436
    %v532 = vpack.c.bf16 %v447, %v444
    %v533 = vpack.c.bf16 %v455, %v452
    %v534 = vpack.c.bf16 %v463, %v460
    %v535 = vpack.c.bf16 %v471, %v468
    %v536 = vpack.c.bf16 %v479, %v476
    %v537 = vpack.c.bf16 %v487, %v484
    %s538 = sadd.s32 0, 0
    %s539 = smul.u32 %s538, 128
    %s540 = sadd.s32 %s539, 0
    %s541 = sld [smem:[#allocation4 + %s540]]
    %p542 = scmp.eq.s32.totalorder %s541, 0
    %s543 = scalar_select %p542, 1.0, 0.0
    %v544 = vld [vmem:[#allocation2] sm:$0xff]
    %v545 = vld [vmem:[#allocation2 + $0x8] sm:$0xff]
    %v546 = vld [vmem:[#allocation2 + $0x10] sm:$0xff]
    %v547 = vld [vmem:[#allocation2 + $0x18] sm:$0xff]
    %v548 = vld [vmem:[#allocation2 + $0x20] sm:$0xff]
    %v549 = vld [vmem:[#allocation2 + $0x28] sm:$0xff]
    %v550 = vld [vmem:[#allocation2 + $0x30] sm:$0xff]
    %v551 = vld [vmem:[#allocation2 + $0x38] sm:$0xff]
    %v552 = vld [vmem:[#allocation2 + $0x40] sm:$0xff]
    %v553 = vld [vmem:[#allocation2 + $0x48] sm:$0xff]
    %v554 = vld [vmem:[#allocation2 + $0x50] sm:$0xff]
    %v555 = vld [vmem:[#allocation2 + $0x58] sm:$0xff]
    %v556 = vld [vmem:[#allocation2 + $0x60] sm:$0xff]
    %v557 = vld [vmem:[#allocation2 + $0x68] sm:$0xff]
    %v558 = vld [vmem:[#allocation2 + $0x70] sm:$0xff]
    %v559 = vld [vmem:[#allocation2 + $0x78] sm:$0xff]
    %v560 = vld [vmem:[#allocation2 + $0x80] sm:$0xff]
    %v561 = vld [vmem:[#allocation2 + $0x88] sm:$0xff]
    %v562 = vld [vmem:[#allocation2 + $0x90] sm:$0xff]
    %v563 = vld [vmem:[#allocation2 + $0x98] sm:$0xff]
    %v564 = vld [vmem:[#allocation2 + $0xa0] sm:$0xff]
    %v565 = vld [vmem:[#allocation2 + $0xa8] sm:$0xff]
    %v566 = vld [vmem:[#allocation2 + $0xb0] sm:$0xff]
    %v567 = vld [vmem:[#allocation2 + $0xb8] sm:$0xff]
    %v568 = vld [vmem:[#allocation2 + $0xc0] sm:$0xff]
    %v569 = vld [vmem:[#allocation2 + $0xc8] sm:$0xff]
    %v570 = vld [vmem:[#allocation2 + $0xd0] sm:$0xff]
    %v571 = vld [vmem:[#allocation2 + $0xd8] sm:$0xff]
    %v572 = vld [vmem:[#allocation2 + $0xe0] sm:$0xff]
    %v573 = vld [vmem:[#allocation2 + $0xe8] sm:$0xff]
    %v574 = vld [vmem:[#allocation2 + $0xf0] sm:$0xff]
    %v575 = vld [vmem:[#allocation2 + $0xf8] sm:$0xff]
    %v576 = vstv %s543
    %v577 = vmul.f32 %v576, %v364
    %v578 = vmul.f32 %v576, %v367
    %v579 = vmul.f32 %v576, %v372
    %v580 = vmul.f32 %v576, %v375
    %v581 = vmul.f32 %v576, %v380
    %v582 = vmul.f32 %v576, %v383
    %v583 = vmul.f32 %v576, %v388
    %v584 = vmul.f32 %v576, %v391
    %v585 = vmul.f32 %v576, %v396
    %v586 = vmul.f32 %v576, %v399
    %v587 = vmul.f32 %v576, %v404
    %v588 = vmul.f32 %v576, %v407
    %v589 = vmul.f32 %v576, %v412
    %v590 = vmul.f32 %v576, %v415
    %v591 = vmul.f32 %v576, %v420
    %v592 = vmul.f32 %v576, %v423
    %v593 = vmul.f32 %v576, %v428
    %v594 = vmul.f32 %v576, %v431
    %v595 = vmul.f32 %v576, %v436
    %v596 = vmul.f32 %v576, %v439
    %v597 = vmul.f32 %v576, %v444
    %v598 = vmul.f32 %v576, %v447
    %v599 = vmul.f32 %v576, %v452
    %v600 = vmul.f32 %v576, %v455
    %v601 = vmul.f32 %v576, %v460
    %v602 = vmul.f32 %v576, %v463
    %v603 = vmul.f32 %v576, %v468
    %v604 = vmul.f32 %v576, %v471
    %v605 = vmul.f32 %v576, %v476
    %v606 = vmul.f32 %v576, %v479
    %v607 = vmul.f32 %v576, %v484
    %v608 = vmul.f32 %v576, %v487
    %v641 = vunpack.c.l.b16 %v490
    %v642 = vunpack.c.h.b16 %v490
    %v643 = vunpack.c.l.b16 %v491
    %v644 = vunpack.c.h.b16 %v491
    %v645 = vunpack.c.l.b16 %v492
    %v646 = vunpack.c.h.b16 %v492
    %v647 = vunpack.c.l.b16 %v493
    %v648 = vunpack.c.h.b16 %v493
    %v649 = vunpack.c.l.b16 %v494
    %v650 = vunpack.c.h.b16 %v494
    %v651 = vunpack.c.l.b16 %v495
    %v652 = vunpack.c.h.b16 %v495
    %v653 = vunpack.c.l.b16 %v496
    %v654 = vunpack.c.h.b16 %v496
    %v655 = vunpack.c.l.b16 %v497
    %v656 = vunpack.c.h.b16 %v497
    %v657 = vunpack.c.l.b16 %v498
    %v658 = vunpack.c.h.b16 %v498
    %v659 = vunpack.c.l.b16 %v499
    %v660 = vunpack.c.h.b16 %v499
    %v661 = vunpack.c.l.b16 %v500
    %v662 = vunpack.c.h.b16 %v500
    %v663 = vunpack.c.l.b16 %v501
    %v664 = vunpack.c.h.b16 %v501
    %v665 = vunpack.c.l.b16 %v502
    %v666 = vunpack.c.h.b16 %v502
    %v667 = vunpack.c.l.b16 %v503
    %v668 = vunpack.c.h.b16 %v503
    %v669 = vunpack.c.l.b16 %v504
    %v670 = vunpack.c.h.b16 %v504
    %v671 = vunpack.c.l.b16 %v505
    %v672 = vunpack.c.h.b16 %v505
    %v673 = vunpack.c.l.b16 %v506
    %v674 = vunpack.c.h.b16 %v506
    %v675 = vunpack.c.l.b16 %v507
    %v676 = vunpack.c.h.b16 %v507
    %v677 = vunpack.c.l.b16 %v508
    %v678 = vunpack.c.h.b16 %v508
    %v679 = vunpack.c.l.b16 %v509
    %v680 = vunpack.c.h.b16 %v509
    %v681 = vunpack.c.l.b16 %v510
    %v682 = vunpack.c.h.b16 %v510
    %v683 = vunpack.c.l.b16 %v511
    %v684 = vunpack.c.h.b16 %v511
    %v685 = vunpack.c.l.b16 %v512
    %v686 = vunpack.c.h.b16 %v512
    %v687 = vunpack.c.l.b16 %v513
    %v688 = vunpack.c.h.b16 %v513
    %v689 = vunpack.c.l.b16 %v514
    %v690 = vunpack.c.h.b16 %v514
    %v691 = vunpack.c.l.b16 %v515
    %v692 = vunpack.c.h.b16 %v515
    %v693 = vunpack.c.l.b16 %v516
    %v694 = vunpack.c.h.b16 %v516
    %v695 = vunpack.c.l.b16 %v517
    %v696 = vunpack.c.h.b16 %v517
    %v697 = vunpack.c.l.b16 %v518
    %v698 = vunpack.c.h.b16 %v518
    %v699 = vunpack.c.l.b16 %v519
    %v700 = vunpack.c.h.b16 %v519
    %v701 = vunpack.c.l.b16 %v520
    %v702 = vunpack.c.h.b16 %v520
    %v703 = vunpack.c.l.b16 %v521
    %v704 = vunpack.c.h.b16 %v521
    %v705 = vpack.c.b16 %v643, %v641
    %v706 = vpack.c.b16 %v644, %v642
    %v707 = vpack.c.b16 %v647, %v645
    %v708 = vpack.c.b16 %v648, %v646
    %v709 = vpack.c.b16 %v651, %v649
    %v710 = vpack.c.b16 %v652, %v650
    %v711 = vpack.c.b16 %v655, %v653
    %v712 = vpack.c.b16 %v656, %v654
    %v713 = vpack.c.b16 %v659, %v657
    %v714 = vpack.c.b16 %v660, %v658
    %v715 = vpack.c.b16 %v663, %v661
    %v716 = vpack.c.b16 %v664, %v662
    %v717 = vpack.c.b16 %v667, %v665
    %v718 = vpack.c.b16 %v668, %v666
    %v719 = vpack.c.b16 %v671, %v669
    %v720 = vpack.c.b16 %v672, %v670
    %v721 = vpack.c.b16 %v675, %v673
    %v722 = vpack.c.b16 %v676, %v674
    %v723 = vpack.c.b16 %v679, %v677
    %v724 = vpack.c.b16 %v680, %v678
    %v725 = vpack.c.b16 %v683, %v681
    %v726 = vpack.c.b16 %v684, %v682
    %v727 = vpack.c.b16 %v687, %v685
    %v728 = vpack.c.b16 %v688, %v686
    %v729 = vpack.c.b16 %v691, %v689
    %v730 = vpack.c.b16 %v692, %v690
    %v731 = vpack.c.b16 %v695, %v693
    %v732 = vpack.c.b16 %v696, %v694
    %v733 = vpack.c.b16 %v699, %v697
    %v734 = vpack.c.b16 %v700, %v698
    %v735 = vpack.c.b16 %v703, %v701
    %v736 = vpack.c.b16 %v704, %v702
    %769 = vmatprep.subr.bf16.mxu0 0
    %770 = vmatpush1.bf16.msra.mxu0 %v529
    %771 = vmatprep.subr.bf16.mxu0 0
    %772 = vmatpush1.bf16.msra.mxu0 %v528
    %773 = vmatprep.subr.bf16.mxu0 0
    %774 = vmatpush1.bf16.msra.mxu0 %v527
    %775 = vmatprep.subr.bf16.mxu0 0
    %776 = vmatpush1.bf16.msra.mxu0 %v526
    %777 = vmatprep.subr.bf16.mxu0 0
    %778 = vmatpush1.bf16.msra.mxu0 %v525
    %779 = vmatprep.subr.bf16.mxu0 0
    %780 = vmatpush1.bf16.msra.mxu0 %v524
    %781 = vmatprep.subr.bf16.mxu0 0
    %782 = vmatpush1.bf16.msra.mxu0 %v523
    %783 = vmatprep.subr.bf16.mxu0 0
    %784 = vmatpush1.bf16.msra.mxu0 %v522
    %785 = vmatprep.subr.bf16.mxu0 0
    %786 = vmatpush2.bf16.msra.mxu0 %v537
    %787 = vmatprep.subr.bf16.mxu0 0
    %788 = vmatpush2.bf16.msra.mxu0 %v536
    %789 = vmatprep.subr.bf16.mxu0 0
    %790 = vmatpush2.bf16.msra.mxu0 %v535
    %791 = vmatprep.subr.bf16.mxu0 0
    %792 = vmatpush2.bf16.msra.mxu0 %v534
    %793 = vmatprep.subr.bf16.mxu0 0
    %794 = vmatpush2.bf16.msra.mxu0 %v533
    %795 = vmatprep.subr.bf16.mxu0 0
    %796 = vmatpush2.bf16.msra.mxu0 %v532
    %797 = vmatprep.subr.bf16.mxu0 0
    %798 = vmatpush2.bf16.msra.mxu0 %v531
    %799 = vmatprep.subr.bf16.mxu0 0
    %800 = vmatpush2.bf16.msra.mxu0 %v530
    %801 = vmatprep.mubr.bf16.mxu0 %v706
    %802 = vmatmul.mubr.bf16.gmra.mxu0 %v705
    %v803 = vpop.f32.mrf.mxu0
    %v804 = vadd.f32 %v577, %v803
    %v805 = vpop.f32.mrf.mxu0
    %v806 = vpop.f32.mrf.mxu0
    %v807 = vadd.f32 %v578, %v806
    %v808 = vpop.f32.mrf.mxu0
    %809 = vmatprep.mubr.bf16.mxu0 %v708
    %810 = vmatmul.mubr.bf16.gmra.mxu0 %v707
    %v811 = vpop.f32.mrf.mxu0
    %v812 = vadd.f32 %v579, %v811
    %v813 = vpop.f32.mrf.mxu0
    %v814 = vpop.f32.mrf.mxu0
    %v815 = vadd.f32 %v580, %v814
    %v816 = vpop.f32.mrf.mxu0
    %817 = vmatprep.mubr.bf16.mxu0 %v710
    %818 = vmatmul.mubr.bf16.gmra.mxu0 %v709
    %v819 = vpop.f32.mrf.mxu0
    %v820 = vadd.f32 %v581, %v819
    %v821 = vpop.f32.mrf.mxu0
    %v822 = vpop.f32.mrf.mxu0
    %v823 = vadd.f32 %v582, %v822
    %v824 = vpop.f32.mrf.mxu0
    %825 = vmatprep.mubr.bf16.mxu0 %v712
    %826 = vmatmul.mubr.bf16.gmra.mxu0 %v711
    %v827 = vpop.f32.mrf.mxu0
    %v828 = vadd.f32 %v583, %v827
    %v829 = vpop.f32.mrf.mxu0
    %v830 = vpop.f32.mrf.mxu0
    %v831 = vadd.f32 %v584, %v830
    %v832 = vpop.f32.mrf.mxu0
    %833 = vmatprep.mubr.bf16.mxu0 %v714
    %834 = vmatmul.mubr.bf16.gmra.mxu0 %v713
    %v835 = vpop.f32.mrf.mxu0
    %v836 = vadd.f32 %v585, %v835
    %v837 = vpop.f32.mrf.mxu0
    %v838 = vpop.f32.mrf.mxu0
    %v839 = vadd.f32 %v586, %v838
    %v840 = vpop.f32.mrf.mxu0
    %841 = vmatprep.mubr.bf16.mxu0 %v716
    %842 = vmatmul.mubr.bf16.gmra.mxu0 %v715
    %v843 = vpop.f32.mrf.mxu0
    %v844 = vadd.f32 %v587, %v843
    %v845 = vpop.f32.mrf.mxu0
    %v846 = vpop.f32.mrf.mxu0
    %v847 = vadd.f32 %v588, %v846
    %v848 = vpop.f32.mrf.mxu0
    %849 = vmatprep.mubr.bf16.mxu0 %v718
    %850 = vmatmul.mubr.bf16.gmra.mxu0 %v717
    %v851 = vpop.f32.mrf.mxu0
    %v852 = vadd.f32 %v589, %v851
    %v853 = vpop.f32.mrf.mxu0
    %v854 = vpop.f32.mrf.mxu0
    %v855 = vadd.f32 %v590, %v854
    %v856 = vpop.f32.mrf.mxu0
    %857 = vmatprep.mubr.bf16.mxu0 %v720
    %858 = vmatmul.mubr.bf16.gmra.mxu0 %v719
    %v859 = vpop.f32.mrf.mxu0
    %v860 = vadd.f32 %v591, %v859
    %v861 = vpop.f32.mrf.mxu0
    %v862 = vpop.f32.mrf.mxu0
    %v863 = vadd.f32 %v592, %v862
    %v864 = vpop.f32.mrf.mxu0
    %865 = vmatprep.mubr.bf16.mxu0 %v722
    %866 = vmatmul.mubr.bf16.gmra.mxu0 %v721
    %v867 = vpop.f32.mrf.mxu0
    %v868 = vadd.f32 %v593, %v867
    %v869 = vpop.f32.mrf.mxu0
    %v870 = vpop.f32.mrf.mxu0
    %v871 = vadd.f32 %v594, %v870
    %v872 = vpop.f32.mrf.mxu0
    %873 = vmatprep.mubr.bf16.mxu0 %v724
    %874 = vmatmul.mubr.bf16.gmra.mxu0 %v723
    %v875 = vpop.f32.mrf.mxu0
    %v876 = vadd.f32 %v595, %v875
    %v877 = vpop.f32.mrf.mxu0
    %v878 = vpop.f32.mrf.mxu0
    %v879 = vadd.f32 %v596, %v878
    %v880 = vpop.f32.mrf.mxu0
    %881 = vmatprep.mubr.bf16.mxu0 %v726
    %882 = vmatmul.mubr.bf16.gmra.mxu0 %v725
    %v883 = vpop.f32.mrf.mxu0
    %v884 = vadd.f32 %v597, %v883
    %v885 = vpop.f32.mrf.mxu0
    %v886 = vpop.f32.mrf.mxu0
    %v887 = vadd.f32 %v598, %v886
    %v888 = vpop.f32.mrf.mxu0
    %889 = vmatprep.mubr.bf16.mxu0 %v728
    %890 = vmatmul.mubr.bf16.gmra.mxu0 %v727
    %v891 = vpop.f32.mrf.mxu0
    %v892 = vadd.f32 %v599, %v891
    %v893 = vpop.f32.mrf.mxu0
    %v894 = vpop.f32.mrf.mxu0
    %v895 = vadd.f32 %v600, %v894
    %v896 = vpop.f32.mrf.mxu0
    %897 = vmatprep.mubr.bf16.mxu0 %v730
    %898 = vmatmul.mubr.bf16.gmra.mxu0 %v729
    %v899 = vpop.f32.mrf.mxu0
    %v900 = vadd.f32 %v601, %v899
    %v901 = vpop.f32.mrf.mxu0
    %v902 = vpop.f32.mrf.mxu0
    %v903 = vadd.f32 %v602, %v902
    %v904 = vpop.f32.mrf.mxu0
    %905 = vmatprep.mubr.bf16.mxu0 %v732
    %906 = vmatmul.mubr.bf16.gmra.mxu0 %v731
    %v907 = vpop.f32.mrf.mxu0
    %v908 = vadd.f32 %v603, %v907
    %v909 = vpop.f32.mrf.mxu0
    %v910 = vpop.f32.mrf.mxu0
    %v911 = vadd.f32 %v604, %v910
    %v912 = vpop.f32.mrf.mxu0
    %913 = vmatprep.mubr.bf16.mxu0 %v734
    %914 = vmatmul.mubr.bf16.gmra.mxu0 %v733
    %v915 = vpop.f32.mrf.mxu0
    %v916 = vadd.f32 %v605, %v915
    %v917 = vpop.f32.mrf.mxu0
    %v918 = vpop.f32.mrf.mxu0
    %v919 = vadd.f32 %v606, %v918
    %v920 = vpop.f32.mrf.mxu0
    %921 = vmatprep.mubr.bf16.mxu0 %v736
    %922 = vmatmul.mubr.bf16.gmra.mxu0 %v735
    %v923 = vpop.f32.mrf.mxu0
    %v924 = vadd.f32 %v607, %v923
    %v925 = vpop.f32.mrf.mxu0
    %v926 = vpop.f32.mrf.mxu0
    %v927 = vadd.f32 %v608, %v926
    %v928 = vpop.f32.mrf.mxu0
    %929 = vdwg.mxu0
    %v930 = vadd.f32 %v544, %v804
    %v931 = vadd.f32 %v545, %v807
    %v932 = vadd.f32 %v546, %v812
    %v933 = vadd.f32 %v547, %v815
    %v934 = vadd.f32 %v548, %v820
    %v935 = vadd.f32 %v549, %v823
    %v936 = vadd.f32 %v550, %v828
    %v937 = vadd.f32 %v551, %v831
    %v938 = vadd.f32 %v552, %v836
    %v939 = vadd.f32 %v553, %v839
    %v940 = vadd.f32 %v554, %v844
    %v941 = vadd.f32 %v555, %v847
    %v942 = vadd.f32 %v556, %v852
    %v943 = vadd.f32 %v557, %v855
    %v944 = vadd.f32 %v558, %v860
    %v945 = vadd.f32 %v559, %v863
    %v946 = vadd.f32 %v560, %v868
    %v947 = vadd.f32 %v561, %v871
    %v948 = vadd.f32 %v562, %v876
    %v949 = vadd.f32 %v563, %v879
    %v950 = vadd.f32 %v564, %v884
    %v951 = vadd.f32 %v565, %v887
    %v952 = vadd.f32 %v566, %v892
    %v953 = vadd.f32 %v567, %v895
    %v954 = vadd.f32 %v568, %v900
    %v955 = vadd.f32 %v569, %v903
    %v956 = vadd.f32 %v570, %v908
    %v957 = vadd.f32 %v571, %v911
    %v958 = vadd.f32 %v572, %v916
    %v959 = vadd.f32 %v573, %v919
    %v960 = vadd.f32 %v574, %v924
    %v961 = vadd.f32 %v575, %v927
    %962 = vst [vmem:[#allocation2] sm:$0xff] %v930
    %963 = vst [vmem:[#allocation2 + $0x8] sm:$0xff] %v931
    %964 = vst [vmem:[#allocation2 + $0x10] sm:$0xff] %v932
    %965 = vst [vmem:[#allocation2 + $0x18] sm:$0xff] %v933
    %966 = vst [vmem:[#allocation2 + $0x20] sm:$0xff] %v934
    %967 = vst [vmem:[#allocation2 + $0x28] sm:$0xff] %v935
    %968 = vst [vmem:[#allocation2 + $0x30] sm:$0xff] %v936
    %969 = vst [vmem:[#allocation2 + $0x38] sm:$0xff] %v937
    %970 = vst [vmem:[#allocation2 + $0x40] sm:$0xff] %v938
    %971 = vst [vmem:[#allocation2 + $0x48] sm:$0xff] %v939
    %972 = vst [vmem:[#allocation2 + $0x50] sm:$0xff] %v940
    %973 = vst [vmem:[#allocation2 + $0x58] sm:$0xff] %v941
    %974 = vst [vmem:[#allocation2 + $0x60] sm:$0xff] %v942
    %975 = vst [vmem:[#allocation2 + $0x68] sm:$0xff] %v943
    %976 = vst [vmem:[#allocation2 + $0x70] sm:$0xff] %v944
    %977 = vst [vmem:[#allocation2 + $0x78] sm:$0xff] %v945
    %978 = vst [vmem:[#allocation2 + $0x80] sm:$0xff] %v946
    %979 = vst [vmem:[#allocation2 + $0x88] sm:$0xff] %v947
    %980 = vst [vmem:[#allocation2 + $0x90] sm:$0xff] %v948
    %981 = vst [vmem:[#allocation2 + $0x98] sm:$0xff] %v949
    %982 = vst [vmem:[#allocation2 + $0xa0] sm:$0xff] %v950
    %983 = vst [vmem:[#allocation2 + $0xa8] sm:$0xff] %v951
    %984 = vst [vmem:[#allocation2 + $0xb0] sm:$0xff] %v952
    %985 = vst [vmem:[#allocation2 + $0xb8] sm:$0xff] %v953
    %986 = vst [vmem:[#allocation2 + $0xc0] sm:$0xff] %v954
    %987 = vst [vmem:[#allocation2 + $0xc8] sm:$0xff] %v955
    %988 = vst [vmem:[#allocation2 + $0xd0] sm:$0xff] %v956
    %989 = vst [vmem:[#allocation2 + $0xd8] sm:$0xff] %v957
    %990 = vst [vmem:[#allocation2 + $0xe0] sm:$0xff] %v958
    %991 = vst [vmem:[#allocation2 + $0xe8] sm:$0xff] %v959
    %992 = vst [vmem:[#allocation2 + $0xf0] sm:$0xff] %v960
    %993 = vst [vmem:[#allocation2 + $0xf8] sm:$0xff] %v961
  $region25: #{gin_forward.3} parent=0 // pred_fallthru
    _
  // Predicated region
  $region26: #{gin_forward.3} parent=0 // pred_check
    %p994 = pneg %p96
  $region27: #{gin_forward.3} parent=0 // pred_check_branch
    %996 = sbr.rel (%p994) target = $region29
  $region28: #{gin_forward.3} parent=0 // pred_region
    %v997 = vld [vmem:[#allocation2] sm:$0xff]
    %v998 = vld [vmem:[#allocation2 + $0x8] sm:$0xff]
    %v999 = vld [vmem:[#allocation2 + $0x10] sm:$0xff]
    %v1000 = vld [vmem:[#allocation2 + $0x18] sm:$0xff]
    %v1001 = vld [vmem:[#allocation2 + $0x20] sm:$0xff]
    %v1002 = vld [vmem:[#allocation2 + $0x28] sm:$0xff]
    %v1003 = vld [vmem:[#allocation2 + $0x30] sm:$0xff]
    %v1004 = vld [vmem:[#allocation2 + $0x38] sm:$0xff]
    %v1005 = vld [vmem:[#allocation2 + $0x40] sm:$0xff]
    %v1006 = vld [vmem:[#allocation2 + $0x48] sm:$0xff]
    %v1007 = vld [vmem:[#allocation2 + $0x50] sm:$0xff]
    %v1008 = vld [vmem:[#allocation2 + $0x58] sm:$0xff]
    %v1009 = vld [vmem:[#allocation2 + $0x60] sm:$0xff]
    %v1010 = vld [vmem:[#allocation2 + $0x68] sm:$0xff]
    %v1011 = vld [vmem:[#allocation2 + $0x70] sm:$0xff]
    %v1012 = vld [vmem:[#allocation2 + $0x78] sm:$0xff]
    %v1013 = vld [vmem:[#allocation2 + $0x80] sm:$0xff]
    %v1014 = vld [vmem:[#allocation2 + $0x88] sm:$0xff]
    %v1015 = vld [vmem:[#allocation2 + $0x90] sm:$0xff]
    %v1016 = vld [vmem:[#allocation2 + $0x98] sm:$0xff]
    %v1017 = vld [vmem:[#allocation2 + $0xa0] sm:$0xff]
    %v1018 = vld [vmem:[#allocation2 + $0xa8] sm:$0xff]
    %v1019 = vld [vmem:[#allocation2 + $0xb0] sm:$0xff]
    %v1020 = vld [vmem:[#allocation2 + $0xb8] sm:$0xff]
    %v1021 = vld [vmem:[#allocation2 + $0xc0] sm:$0xff]
    %v1022 = vld [vmem:[#allocation2 + $0xc8] sm:$0xff]
    %v1023 = vld [vmem:[#allocation2 + $0xd0] sm:$0xff]
    %v1024 = vld [vmem:[#allocation2 + $0xd8] sm:$0xff]
    %v1025 = vld [vmem:[#allocation2 + $0xe0] sm:$0xff]
    %v1026 = vld [vmem:[#allocation2 + $0xe8] sm:$0xff]
    %v1027 = vld [vmem:[#allocation2 + $0xf0] sm:$0xff]
    %v1028 = vld [vmem:[#allocation2 + $0xf8] sm:$0xff]
    %v1029 = vld [vmem:[%s5] sm:$0x1]
    %v1031 = vlaneseq
    %v1032 = vshrl.u32 %v1031, 7
    %v1033 = vsub.s32 0, %v1032
    %v1034 = vrot.slane %v1029, %v1033
    %v1036 = vadd.f32 %v997, %v1034
    %v1037 = vadd.f32 %v998, %v1034
    %v1038 = vadd.f32 %v999, %v1034
    %v1039 = vadd.f32 %v1000, %v1034
    %v1040 = vadd.f32 %v1001, %v1034
    %v1041 = vadd.f32 %v1002, %v1034
    %v1042 = vadd.f32 %v1003, %v1034
    %v1043 = vadd.f32 %v1004, %v1034
    %v1044 = vadd.f32 %v1005, %v1034
    %v1045 = vadd.f32 %v1006, %v1034
    %v1046 = vadd.f32 %v1007, %v1034
    %v1047 = vadd.f32 %v1008, %v1034
    %v1048 = vadd.f32 %v1009, %v1034
    %v1049 = vadd.f32 %v1010, %v1034
    %v1050 = vadd.f32 %v1011, %v1034
    %v1051 = vadd.f32 %v1012, %v1034
    %v1052 = vadd.f32 %v1013, %v1034
    %v1053 = vadd.f32 %v1014, %v1034
    %v1054 = vadd.f32 %v1015, %v1034
    %v1055 = vadd.f32 %v1016, %v1034
    %v1056 = vadd.f32 %v1017, %v1034
    %v1057 = vadd.f32 %v1018, %v1034
    %v1058 = vadd.f32 %v1019, %v1034
    %v1059 = vadd.f32 %v1020, %v1034
    %v1060 = vadd.f32 %v1021, %v1034
    %v1061 = vadd.f32 %v1022, %v1034
    %v1062 = vadd.f32 %v1023, %v1034
    %v1063 = vadd.f32 %v1024, %v1034
    %v1064 = vadd.f32 %v1025, %v1034
    %v1065 = vadd.f32 %v1026, %v1034
    %v1066 = vadd.f32 %v1027, %v1034
    %v1067 = vadd.f32 %v1028, %v1034
    %1068 = vst [vmem:[%s6] sm:$0xff] %v1036
    %1069 = vst [vmem:[%s6 + $0x8] sm:$0xff] %v1037
    %1070 = vst [vmem:[%s6 + $0x10] sm:$0xff] %v1038
    %1071 = vst [vmem:[%s6 + $0x18] sm:$0xff] %v1039
    %1072 = vst [vmem:[%s6 + $0x20] sm:$0xff] %v1040
    %1073 = vst [vmem:[%s6 + $0x28] sm:$0xff] %v1041
    %1074 = vst [vmem:[%s6 + $0x30] sm:$0xff] %v1042
    %1075 = vst [vmem:[%s6 + $0x38] sm:$0xff] %v1043
    %1076 = vst [vmem:[%s6 + $0x40] sm:$0xff] %v1044
    %1077 = vst [vmem:[%s6 + $0x48] sm:$0xff] %v1045
    %1078 = vst [vmem:[%s6 + $0x50] sm:$0xff] %v1046
    %1079 = vst [vmem:[%s6 + $0x58] sm:$0xff] %v1047
    %1080 = vst [vmem:[%s6 + $0x60] sm:$0xff] %v1048
    %1081 = vst [vmem:[%s6 + $0x68] sm:$0xff] %v1049
    %1082 = vst [vmem:[%s6 + $0x70] sm:$0xff] %v1050
    %1083 = vst [vmem:[%s6 + $0x78] sm:$0xff] %v1051
    %1084 = vst [vmem:[%s6 + $0x80] sm:$0xff] %v1052
    %1085 = vst [vmem:[%s6 + $0x88] sm:$0xff] %v1053
    %1086 = vst [vmem:[%s6 + $0x90] sm:$0xff] %v1054
    %1087 = vst [vmem:[%s6 + $0x98] sm:$0xff] %v1055
    %1088 = vst [vmem:[%s6 + $0xa0] sm:$0xff] %v1056
    %1089 = vst [vmem:[%s6 + $0xa8] sm:$0xff] %v1057
    %1090 = vst [vmem:[%s6 + $0xb0] sm:$0xff] %v1058
    %1091 = vst [vmem:[%s6 + $0xb8] sm:$0xff] %v1059
    %1092 = vst [vmem:[%s6 + $0xc0] sm:$0xff] %v1060
    %1093 = vst [vmem:[%s6 + $0xc8] sm:$0xff] %v1061
    %1094 = vst [vmem:[%s6 + $0xd0] sm:$0xff] %v1062
    %1095 = vst [vmem:[%s6 + $0xd8] sm:$0xff] %v1063
    %1096 = vst [vmem:[%s6 + $0xe0] sm:$0xff] %v1064
    %1097 = vst [vmem:[%s6 + $0xe8] sm:$0xff] %v1065
    %1098 = vst [vmem:[%s6 + $0xf0] sm:$0xff] %v1066
    %1099 = vst [vmem:[%s6 + $0xf8] sm:$0xff] %v1067
  $region29: #{gin_forward.3} parent=0 // pred_fallthru
    _
  // Predicated region
  $region30: #{gin_forward.3} parent=0 // pred_check
    _
  $region31: #{gin_forward.3} parent=0 // pred_check_branch
    %1101 = sbr.rel (0) target = $region33
  $region32: #{gin_forward.3} parent=0 // pred_region
    _
  $region33: #{gin_forward.3} parent=0 // pred_fallthru
    _
  // Predicated region
  $region34: #{gin_forward.3} parent=0 // pred_check
    _
  $region35: #{gin_forward.3} parent=0 // pred_check_branch
    %1103 = sbr.rel (0) target = $region37
  $region36: #{gin_forward.3} parent=0 // pred_region
    _
  $region37: #{gin_forward.3} parent=0 // pred_fallthru
    _

// kernel: gin_forward.2
$region0: #{gin_forward.2}
  #allocation0 [shape = 'u32[]', space=smem, size = 0x4, offset = 0x4, fixed_abs, tag = 'smem constant byte address 0x4 - core index']
  #allocation1 [shape = 'u32[144,128]{1,0:T(1,128)}', space=vmem, size = 0x12000, scoped, tag = 'internal scratch']
  #allocation2 [shape = 'f32[256,128]{1,0:T(8,128)}', space=vmem, size = 0x20000, scoped, tag = 'scratch operand']
  #allocation3 [shape = 's32[1]{0}', space=sflag, size = 0x4, scoped, tag = 'scoped memory for gin_forward.2']
  #allocation4 [shape = 's32[1,1]{1,0:T(1,128)S(6)}', space=smem, size = 0x200, scoped, tag = 'prefetched SMEM operand 0']
  #allocation5 [shape = 's32[1]{0:T(128)S(6)}', space=smem, size = 0x200, scoped, tag = 'prefetched SMEM operand 1']
  %s0 = inlined_call_operand.<no memory space> [shape: s32[1,1], index: 0, kind: input, shape index: {}]
  %s1 = inlined_call_operand.<no memory space> [shape: s32[1], index: 1, kind: input, shape index: {}]
  %s2 = inlined_call_operand.vmem [shape: bf16[256,256], index: 2, kind: input, shape index: {}]
  %s3 = inlined_call_operand.vmem [shape: bf16[256,128], index: 3, kind: input, shape index: {}]
  %s4 = inlined_call_operand.vmem [shape: bf16[128,128], index: 4, kind: input, shape index: {}]
  %s5 = inlined_call_operand.vmem [shape: f32[1,128], index: 5, kind: input, shape index: {}]
  %s6 = inlined_call_operand.vmem [shape: bf16[256,128], index: 6, kind: output, shape index: {}]
  %s7 = sld [smem:[#allocation0]]
  $region38: #{gin_forward.2} parent=0
    _
  %s9 = ssub.s32 1, %s7
  %s10 = scalar_select 0, %s9, %s7
  %11 = sst [smem:[#allocation4]] %s0
  %12 = sst [smem:[#allocation5]] %s1
  // Predicated region
  $region2: #{gin_forward.2} parent=0 // pred_check
    _
  $region3: #{gin_forward.2} parent=0 // pred_check_branch
    %14 = sbr.rel (0) target = $region5
  $region4: #{gin_forward.2} parent=0 // pred_region
    %s15 = sadd.s32 0, 0
    %s16 = smul.u32 %s15, 128
    %s17 = sadd.s32 %s16, 0
    %s18 = sld [smem:[#allocation4 + %s17]]
    %s19 = smul.u32 2, %s18
    %p20 = scmp.lt.s32.totalorder %s19, 1
    %s21 = scalar_select %p20, %s19, 1
    %s22 = smul.addr %s21, 4
    %s23 = scalar_lea.vmem %s2, %s22
    %s24 = sadd.s32 0, 0
    %s25 = smul.u32 %s24, 128
    %s26 = sadd.s32 %s25, 0
    %s27 = sld [smem:[#allocation4 + %s26]]
    %s28 = smul.u32 2, %s27
  $region5: #{gin_forward.2} parent=0 // pred_fallthru
    _
  // Predicated region
  $region6: #{gin_forward.2} parent=0 // pred_check
    _
  $region7: #{gin_forward.2} parent=0 // pred_check_branch
    %30 = sbr.rel (0) target = $region9
  $region8: #{gin_forward.2} parent=0 // pred_region
    %s31 = sadd.s32 0, 0
    %s32 = smul.u32 %s31, 128
    %s33 = sadd.s32 %s32, 0
    %s34 = sld [smem:[#allocation4 + %s33]]
    %s35 = smul.u32 32, %s34
    %p36 = scmp.lt.s32.totalorder %s35, 31
    %s37 = scalar_select %p36, %s35, 31
    %s38 = smul.addr %s37, 4
    %s39 = scalar_lea.vmem %s3, %s38
    %s40 = sadd.s32 0, 0
    %s41 = smul.u32 %s40, 128
    %s42 = sadd.s32 %s41, 0
    %s43 = sld [smem:[#allocation4 + %s42]]
    %s44 = smul.u32 32, %s43
  $region9: #{gin_forward.2} parent=0 // pred_fallthru
    _
  // Predicated region
  $region10: #{gin_forward.2} parent=0 // pred_check
    _
  $region11: #{gin_forward.2} parent=0 // pred_check_branch
    %46 = sbr.rel (0) target = $region13
  $region12: #{gin_forward.2} parent=0 // pred_region
    _
  $region13: #{gin_forward.2} parent=0 // pred_fallthru
    _
  // Predicated region
  $region14: #{gin_forward.2} parent=0 // pred_check
    _
  $region15: #{gin_forward.2} parent=0 // pred_check_branch
    %48 = sbr.rel (0) target = $region17
  $region16: #{gin_forward.2} parent=0 // pred_region
    _
  $region17: #{gin_forward.2} parent=0 // pred_fallthru
    _
  %s49 = sadd.s32 0, 0
  %s50 = smul.u32 %s49, 128
  %s51 = sadd.s32 %s50, 0
  %s52 = sld [smem:[#allocation4 + %s51]]
  %s53 = smul.u32 2, %s52
  %p54 = scmp.lt.s32.totalorder %s53, 1
  %s55 = scalar_select %p54, %s53, 1
  %s56 = smul.addr %s55, 4
  %s57 = scalar_lea.vmem %s2, %s56
  %s58 = sadd.s32 0, 0
  %s59 = smul.u32 %s58, 128
  %s60 = sadd.s32 %s59, 0
  %s61 = sld [smem:[#allocation4 + %s60]]
  %s62 = smul.u32 32, %s61
  %p63 = scmp.lt.s32.totalorder %s62, 31
  %s64 = scalar_select %p63, %s62, 31
  %s65 = smul.addr %s64, 4
  %s66 = scalar_lea.vmem %s3, %s65
  %s67 = sadd.s32 0, 0
  %s68 = smul.u32 %s67, 128
  %s69 = sadd.s32 %s68, 0
  %s70 = sld [smem:[#allocation4 + %s69]]
  %s71 = smul.u32 2, %s70
  %p72 = scmp.lt.s32.totalorder %s71, 1
  %s73 = scalar_select %p72, %s71, 1
  %s74 = smul.addr %s73, 4
  %s75 = scalar_lea.vmem %s2, %s74
  %s76 = sadd.s32 0, 0
  %s77 = smul.u32 %s76, 128
  %s78 = sadd.s32 %s77, 0
  %s79 = sld [smem:[#allocation4 + %s78]]
  %s80 = smul.u32 2, %s79
  %s81 = sadd.s32 0, 0
  %s82 = smul.u32 %s81, 128
  %s83 = sadd.s32 %s82, 0
  %s84 = sld [smem:[#allocation4 + %s83]]
  %s85 = smul.u32 32, %s84
  %p86 = scmp.lt.s32.totalorder %s85, 31
  %s87 = scalar_select %p86, %s85, 31
  %s88 = smul.addr %s87, 4
  %s89 = scalar_lea.vmem %s3, %s88
  %s90 = sadd.s32 0, 0
  %s91 = smul.u32 %s90, 128
  %s92 = sadd.s32 %s91, 0
  %s93 = sld [smem:[#allocation4 + %s92]]
  %s94 = smul.u32 32, %s93
  %p96 = scmp.eq.s32.totalorder 0, 0
  // Predicated region
  $region18: #{gin_forward.2} parent=0 // pred_check
    %p97 = pneg %p96
  $region19: #{gin_forward.2} parent=0 // pred_check_branch
    %99 = sbr.rel (%p97) target = $region21
  $region20: #{gin_forward.2} parent=0 // pred_region
    %100 = vst [vmem:[#allocation2] sm:$0xff] 0.0
    %101 = vst [vmem:[#allocation2 + $0x8] sm:$0xff] 0.0
    %102 = vst [vmem:[#allocation2 + $0x10] sm:$0xff] 0.0
    %103 = vst [vmem:[#allocation2 + $0x18] sm:$0xff] 0.0
    %104 = vst [vmem:[#allocation2 + $0x20] sm:$0xff] 0.0
    %105 = vst [vmem:[#allocation2 + $0x28] sm:$0xff] 0.0
    %106 = vst [vmem:[#allocation2 + $0x30] sm:$0xff] 0.0
    %107 = vst [vmem:[#allocation2 + $0x38] sm:$0xff] 0.0
    %108 = vst [vmem:[#allocation2 + $0x40] sm:$0xff] 0.0
    %109 = vst [vmem:[#allocation2 + $0x48] sm:$0xff] 0.0
    %110 = vst [vmem:[#allocation2 + $0x50] sm:$0xff] 0.0
    %111 = vst [vmem:[#allocation2 + $0x58] sm:$0xff] 0.0
    %112 = vst [vmem:[#allocation2 + $0x60] sm:$0xff] 0.0
    %113 = vst [vmem:[#allocation2 + $0x68] sm:$0xff] 0.0
    %114 = vst [vmem:[#allocation2 + $0x70] sm:$0xff] 0.0
    %115 = vst [vmem:[#allocation2 + $0x78] sm:$0xff] 0.0
    %116 = vst [vmem:[#allocation2 + $0x80] sm:$0xff] 0.0
    %117 = vst [vmem:[#allocation2 + $0x88] sm:$0xff] 0.0
    %118 = vst [vmem:[#allocation2 + $0x90] sm:$0xff] 0.0
    %119 = vst [vmem:[#allocation2 + $0x98] sm:$0xff] 0.0
    %120 = vst [vmem:[#allocation2 + $0xa0] sm:$0xff] 0.0
    %121 = vst [vmem:[#allocation2 + $0xa8] sm:$0xff] 0.0
    %122 = vst [vmem:[#allocation2 + $0xb0] sm:$0xff] 0.0
    %123 = vst [vmem:[#allocation2 + $0xb8] sm:$0xff] 0.0
    %124 = vst [vmem:[#allocation2 + $0xc0] sm:$0xff] 0.0
    %125 = vst [vmem:[#allocation2 + $0xc8] sm:$0xff] 0.0
    %126 = vst [vmem:[#allocation2 + $0xd0] sm:$0xff] 0.0
    %127 = vst [vmem:[#allocation2 + $0xd8] sm:$0xff] 0.0
    %128 = vst [vmem:[#allocation2 + $0xe0] sm:$0xff] 0.0
    %129 = vst [vmem:[#allocation2 + $0xe8] sm:$0xff] 0.0
    %130 = vst [vmem:[#allocation2 + $0xf0] sm:$0xff] 0.0
    %131 = vst [vmem:[#allocation2 + $0xf8] sm:$0xff] 0.0
  $region21: #{gin_forward.2} parent=0 // pred_fallthru
    _
  %s132 = sld [smem:[#allocation5]]
  %p133 = scmp.lt.s32.totalorder 0, %s132
  // Predicated region
  $region22: #{gin_forward.2} parent=0 // pred_check
    %p134 = pneg %p133
  $region23: #{gin_forward.2} parent=0 // pred_check_branch
    %136 = sbr.rel (%p134) target = $region25
  $region24: #{gin_forward.2} parent=0 // pred_region
    %v137 = vld [vmem:[%s89] sm:$0xf]
    %v138 = vld [vmem:[%s89 + $0x4] sm:$0xf]
    %v139 = vld [vmem:[%s89 + $0x8] sm:$0xf]
    %v140 = vld [vmem:[%s89 + $0xc] sm:$0xf]
    %v141 = vld [vmem:[%s89 + $0x10] sm:$0xf]
    %v142 = vld [vmem:[%s89 + $0x14] sm:$0xf]
    %v143 = vld [vmem:[%s89 + $0x18] sm:$0xf]
    %v144 = vld [vmem:[%s89 + $0x1c] sm:$0xf]
    %v145 = vld [vmem:[%s89 + $0x20] sm:$0xf]
    %v146 = vld [vmem:[%s89 + $0x24] sm:$0xf]
    %v147 = vld [vmem:[%s89 + $0x28] sm:$0xf]
    %v148 = vld [vmem:[%s89 + $0x2c] sm:$0xf]
    %v149 = vld [vmem:[%s89 + $0x30] sm:$0xf]
    %v150 = vld [vmem:[%s89 + $0x34] sm:$0xf]
    %v151 = vld [vmem:[%s89 + $0x38] sm:$0xf]
    %v152 = vld [vmem:[%s89 + $0x3c] sm:$0xf]
    %v153 = vld [vmem:[%s89 + $0x40] sm:$0xf]
    %v154 = vld [vmem:[%s89 + $0x44] sm:$0xf]
    %v155 = vld [vmem:[%s89 + $0x48] sm:$0xf]
    %v156 = vld [vmem:[%s89 + $0x4c] sm:$0xf]
    %v157 = vld [vmem:[%s89 + $0x50] sm:$0xf]
    %v158 = vld [vmem:[%s89 + $0x54] sm:$0xf]
    %v159 = vld [vmem:[%s89 + $0x58] sm:$0xf]
    %v160 = vld [vmem:[%s89 + $0x5c] sm:$0xf]
    %v161 = vld [vmem:[%s89 + $0x60] sm:$0xf]
    %v162 = vld [vmem:[%s89 + $0x64] sm:$0xf]
    %v163 = vld [vmem:[%s89 + $0x68] sm:$0xf]
    %v164 = vld [vmem:[%s89 + $0x6c] sm:$0xf]
    %v165 = vld [vmem:[%s89 + $0x70] sm:$0xf]
    %v166 = vld [vmem:[%s89 + $0x74] sm:$0xf]
    %v167 = vld [vmem:[%s89 + $0x78] sm:$0xf]
    %v168 = vld [vmem:[%s89 + $0x7c] sm:$0xf]
    %v169 = vld [vmem:[%s4] sm:$0xf]
    %v170 = vld [vmem:[%s4 + $0x4] sm:$0xf]
    %v171 = vld [vmem:[%s4 + $0x8] sm:$0xf]
    %v172 = vld [vmem:[%s4 + $0xc] sm:$0xf]
    %v173 = vld [vmem:[%s4 + $0x10] sm:$0xf]
    %v174 = vld [vmem:[%s4 + $0x14] sm:$0xf]
    %v175 = vld [vmem:[%s4 + $0x18] sm:$0xf]
    %v176 = vld [vmem:[%s4 + $0x1c] sm:$0xf]
    %v177 = vld [vmem:[%s4 + $0x20] sm:$0xf]
    %v178 = vld [vmem:[%s4 + $0x24] sm:$0xf]
    %v179 = vld [vmem:[%s4 + $0x28] sm:$0xf]
    %v180 = vld [vmem:[%s4 + $0x2c] sm:$0xf]
    %v181 = vld [vmem:[%s4 + $0x30] sm:$0xf]
    %v182 = vld [vmem:[%s4 + $0x34] sm:$0xf]
    %v183 = vld [vmem:[%s4 + $0x38] sm:$0xf]
    %v184 = vld [vmem:[%s4 + $0x3c] sm:$0xf]
    %v217 = vunpack.c.l.b16 %v137
    %v218 = vunpack.c.l.b16 %v138
    %v219 = vunpack.c.l.b16 %v139
    %v220 = vunpack.c.l.b16 %v140
    %v221 = vunpack.c.l.b16 %v141
    %v222 = vunpack.c.l.b16 %v142
    %v223 = vunpack.c.l.b16 %v143
    %v224 = vunpack.c.l.b16 %v144
    %v225 = vunpack.c.l.b16 %v145
    %v226 = vunpack.c.l.b16 %v146
    %v227 = vunpack.c.l.b16 %v147
    %v228 = vunpack.c.l.b16 %v148
    %v229 = vunpack.c.l.b16 %v149
    %v230 = vunpack.c.l.b16 %v150
    %v231 = vunpack.c.l.b16 %v151
    %v232 = vunpack.c.l.b16 %v152
    %v233 = vunpack.c.l.b16 %v153
    %v234 = vunpack.c.l.b16 %v154
    %v235 = vunpack.c.l.b16 %v155
    %v236 = vunpack.c.l.b16 %v156
    %v237 = vunpack.c.l.b16 %v157
    %v238 = vunpack.c.l.b16 %v158
    %v239 = vunpack.c.l.b16 %v159
    %v240 = vunpack.c.l.b16 %v160
    %v241 = vunpack.c.l.b16 %v161
    %v242 = vunpack.c.l.b16 %v162
    %v243 = vunpack.c.l.b16 %v163
    %v244 = vunpack.c.l.b16 %v164
    %v245 = vunpack.c.l.b16 %v165
    %v246 = vunpack.c.l.b16 %v166
    %v247 = vunpack.c.l.b16 %v167
    %v248 = vunpack.c.l.b16 %v168
    %v249 = vpack.c.b16 %v218, %v217
    %v250 = vpack.c.b16 %v220, %v219
    %v251 = vpack.c.b16 %v222, %v221
    %v252 = vpack.c.b16 %v224, %v223
    %v253 = vpack.c.b16 %v226, %v225
    %v254 = vpack.c.b16 %v228, %v227
    %v255 = vpack.c.b16 %v230, %v229
    %v256 = vpack.c.b16 %v232, %v231
    %v257 = vpack.c.b16 %v234, %v233
    %v258 = vpack.c.b16 %v236, %v235
    %v259 = vpack.c.b16 %v238, %v237
    %v260 = vpack.c.b16 %v240, %v239
    %v261 = vpack.c.b16 %v242, %v241
    %v262 = vpack.c.b16 %v244, %v243
    %v263 = vpack.c.b16 %v246, %v245
    %v264 = vpack.c.b16 %v248, %v247
    %v297 = vunpack.c.l.b16 %v169
    %v298 = vunpack.c.l.b16 %v170
    %v299 = vunpack.c.l.b16 %v171
    %v300 = vunpack.c.l.b16 %v172
    %v301 = vunpack.c.l.b16 %v173
    %v302 = vunpack.c.l.b16 %v174
    %v303 = vunpack.c.l.b16 %v175
    %v304 = vunpack.c.l.b16 %v176
    %v305 = vunpack.c.l.b16 %v177
    %v306 = vunpack.c.l.b16 %v178
    %v307 = vunpack.c.l.b16 %v179
    %v308 = vunpack.c.l.b16 %v180
    %v309 = vunpack.c.l.b16 %v181
    %v310 = vunpack.c.l.b16 %v182
    %v311 = vunpack.c.l.b16 %v183
    %v312 = vunpack.c.l.b16 %v184
    %v313 = vpack.c.b16 %v298, %v297
    %v314 = vpack.c.b16 %v300, %v299
    %v315 = vpack.c.b16 %v302, %v301
    %v316 = vpack.c.b16 %v304, %v303
    %v317 = vpack.c.b16 %v306, %v305
    %v318 = vpack.c.b16 %v308, %v307
    %v319 = vpack.c.b16 %v310, %v309
    %v320 = vpack.c.b16 %v312, %v311
    %329 = vmatprep.subr.bf16.mxu0 0
    %330 = vmatpush1.bf16.msra.mxu0 %v320
    %331 = vmatprep.subr.bf16.mxu0 0
    %332 = vmatpush1.bf16.msra.mxu0 %v319
    %333 = vmatprep.subr.bf16.mxu0 0
    %334 = vmatpush1.bf16.msra.mxu0 %v318
    %335 = vmatprep.subr.bf16.mxu0 0
    %336 = vmatpush1.bf16.msra.mxu0 %v317
    %337 = vmatprep.subr.bf16.mxu0 0
    %338 = vmatpush1.bf16.msra.mxu0 %v316
    %339 = vmatprep.subr.bf16.mxu0 0
    %340 = vmatpush1.bf16.msra.mxu0 %v315
    %341 = vmatprep.subr.bf16.mxu0 0
    %342 = vmatpush1.bf16.msra.mxu0 %v314
    %343 = vmatprep.subr.bf16.mxu0 0
    %344 = vmatpush1.bf16.msra.mxu0 %v313
    %345 = vmatprep.subr.bf16.mxu0 0
    %346 = vmatpush2.bf16.msra.mxu0 0
    %347 = vmatprep.subr.bf16.mxu0 0
    %348 = vmatpush2.bf16.msra.mxu0 0
    %349 = vmatprep.subr.bf16.mxu0 0
    %350 = vmatpush2.bf16.msra.mxu0 0
    %351 = vmatprep.subr.bf16.mxu0 0
    %352 = vmatpush2.bf16.msra.mxu0 0
    %353 = vmatprep.subr.bf16.mxu0 0
    %354 = vmatpush2.bf16.msra.mxu0 0
    %355 = vmatprep.subr.bf16.mxu0 0
    %356 = vmatpush2.bf16.msra.mxu0 0
    %357 = vmatprep.subr.bf16.mxu0 0
    %358 = vmatpush2.bf16.msra.mxu0 0
    %359 = vmatprep.subr.bf16.mxu0 0
    %360 = vmatpush2.bf16.msra.mxu0 0
    %361 = vmatprep.mubr.bf16.mxu0 0
    %362 = vmatmul.mubr.bf16.gmra.mxu0 %v249
    %v363 = vpop.f32.mrf.mxu0
    %v364 = vadd.f32 0.0, %v363
    %v365 = vpop.f32.mrf.mxu0
    %v366 = vpop.f32.mrf.mxu0
    %v367 = vadd.f32 0.0, %v366
    %v368 = vpop.f32.mrf.mxu0
    %369 = vmatprep.mubr.bf16.mxu0 0
    %370 = vmatmul.mubr.bf16.gmra.mxu0 %v250
    %v371 = vpop.f32.mrf.mxu0
    %v372 = vadd.f32 0.0, %v371
    %v373 = vpop.f32.mrf.mxu0
    %v374 = vpop.f32.mrf.mxu0
    %v375 = vadd.f32 0.0, %v374
    %v376 = vpop.f32.mrf.mxu0
    %377 = vmatprep.mubr.bf16.mxu0 0
    %378 = vmatmul.mubr.bf16.gmra.mxu0 %v251
    %v379 = vpop.f32.mrf.mxu0
    %v380 = vadd.f32 0.0, %v379
    %v381 = vpop.f32.mrf.mxu0
    %v382 = vpop.f32.mrf.mxu0
    %v383 = vadd.f32 0.0, %v382
    %v384 = vpop.f32.mrf.mxu0
    %385 = vmatprep.mubr.bf16.mxu0 0
    %386 = vmatmul.mubr.bf16.gmra.mxu0 %v252
    %v387 = vpop.f32.mrf.mxu0
    %v388 = vadd.f32 0.0, %v387
    %v389 = vpop.f32.mrf.mxu0
    %v390 = vpop.f32.mrf.mxu0
    %v391 = vadd.f32 0.0, %v390
    %v392 = vpop.f32.mrf.mxu0
    %393 = vmatprep.mubr.bf16.mxu0 0
    %394 = vmatmul.mubr.bf16.gmra.mxu0 %v253
    %v395 = vpop.f32.mrf.mxu0
    %v396 = vadd.f32 0.0, %v395
    %v397 = vpop.f32.mrf.mxu0
    %v398 = vpop.f32.mrf.mxu0
    %v399 = vadd.f32 0.0, %v398
    %v400 = vpop.f32.mrf.mxu0
    %401 = vmatprep.mubr.bf16.mxu0 0
    %402 = vmatmul.mubr.bf16.gmra.mxu0 %v254
    %v403 = vpop.f32.mrf.mxu0
    %v404 = vadd.f32 0.0, %v403
    %v405 = vpop.f32.mrf.mxu0
    %v406 = vpop.f32.mrf.mxu0
    %v407 = vadd.f32 0.0, %v406
    %v408 = vpop.f32.mrf.mxu0
    %409 = vmatprep.mubr.bf16.mxu0 0
    %410 = vmatmul.mubr.bf16.gmra.mxu0 %v255
    %v411 = vpop.f32.mrf.mxu0
    %v412 = vadd.f32 0.0, %v411
    %v413 = vpop.f32.mrf.mxu0
    %v414 = vpop.f32.mrf.mxu0
    %v415 = vadd.f32 0.0, %v414
    %v416 = vpop.f32.mrf.mxu0
    %417 = vmatprep.mubr.bf16.mxu0 0
    %418 = vmatmul.mubr.bf16.gmra.mxu0 %v256
    %v419 = vpop.f32.mrf.mxu0
    %v420 = vadd.f32 0.0, %v419
    %v421 = vpop.f32.mrf.mxu0
    %v422 = vpop.f32.mrf.mxu0
    %v423 = vadd.f32 0.0, %v422
    %v424 = vpop.f32.mrf.mxu0
    %425 = vmatprep.mubr.bf16.mxu0 0
    %426 = vmatmul.mubr.bf16.gmra.mxu0 %v257
    %v427 = vpop.f32.mrf.mxu0
    %v428 = vadd.f32 0.0, %v427
    %v429 = vpop.f32.mrf.mxu0
    %v430 = vpop.f32.mrf.mxu0
    %v431 = vadd.f32 0.0, %v430
    %v432 = vpop.f32.mrf.mxu0
    %433 = vmatprep.mubr.bf16.mxu0 0
    %434 = vmatmul.mubr.bf16.gmra.mxu0 %v258
    %v435 = vpop.f32.mrf.mxu0
    %v436 = vadd.f32 0.0, %v435
    %v437 = vpop.f32.mrf.mxu0
    %v438 = vpop.f32.mrf.mxu0
    %v439 = vadd.f32 0.0, %v438
    %v440 = vpop.f32.mrf.mxu0
    %441 = vmatprep.mubr.bf16.mxu0 0
    %442 = vmatmul.mubr.bf16.gmra.mxu0 %v259
    %v443 = vpop.f32.mrf.mxu0
    %v444 = vadd.f32 0.0, %v443
    %v445 = vpop.f32.mrf.mxu0
    %v446 = vpop.f32.mrf.mxu0
    %v447 = vadd.f32 0.0, %v446
    %v448 = vpop.f32.mrf.mxu0
    %449 = vmatprep.mubr.bf16.mxu0 0
    %450 = vmatmul.mubr.bf16.gmra.mxu0 %v260
    %v451 = vpop.f32.mrf.mxu0
    %v452 = vadd.f32 0.0, %v451
    %v453 = vpop.f32.mrf.mxu0
    %v454 = vpop.f32.mrf.mxu0
    %v455 = vadd.f32 0.0, %v454
    %v456 = vpop.f32.mrf.mxu0
    %457 = vmatprep.mubr.bf16.mxu0 0
    %458 = vmatmul.mubr.bf16.gmra.mxu0 %v261
    %v459 = vpop.f32.mrf.mxu0
    %v460 = vadd.f32 0.0, %v459
    %v461 = vpop.f32.mrf.mxu0
    %v462 = vpop.f32.mrf.mxu0
    %v463 = vadd.f32 0.0, %v462
    %v464 = vpop.f32.mrf.mxu0
    %465 = vmatprep.mubr.bf16.mxu0 0
    %466 = vmatmul.mubr.bf16.gmra.mxu0 %v262
    %v467 = vpop.f32.mrf.mxu0
    %v468 = vadd.f32 0.0, %v467
    %v469 = vpop.f32.mrf.mxu0
    %v470 = vpop.f32.mrf.mxu0
    %v471 = vadd.f32 0.0, %v470
    %v472 = vpop.f32.mrf.mxu0
    %473 = vmatprep.mubr.bf16.mxu0 0
    %474 = vmatmul.mubr.bf16.gmra.mxu0 %v263
    %v475 = vpop.f32.mrf.mxu0
    %v476 = vadd.f32 0.0, %v475
    %v477 = vpop.f32.mrf.mxu0
    %v478 = vpop.f32.mrf.mxu0
    %v479 = vadd.f32 0.0, %v478
    %v480 = vpop.f32.mrf.mxu0
    %481 = vmatprep.mubr.bf16.mxu0 0
    %482 = vmatmul.mubr.bf16.gmra.mxu0 %v264
    %v483 = vpop.f32.mrf.mxu0
    %v484 = vadd.f32 0.0, %v483
    %v485 = vpop.f32.mrf.mxu0
    %v486 = vpop.f32.mrf.mxu0
    %v487 = vadd.f32 0.0, %v486
    %v488 = vpop.f32.mrf.mxu0
    %489 = vdwg.mxu0
    %v490 = vld [vmem:[%s75] sm:$0xff]
    %v491 = vld [vmem:[%s75 + $0x8] sm:$0xff]
    %v492 = vld [vmem:[%s75 + $0x10] sm:$0xff]
    %v493 = vld [vmem:[%s75 + $0x18] sm:$0xff]
    %v494 = vld [vmem:[%s75 + $0x20] sm:$0xff]
    %v495 = vld [vmem:[%s75 + $0x28] sm:$0xff]
    %v496 = vld [vmem:[%s75 + $0x30] sm:$0xff]
    %v497 = vld [vmem:[%s75 + $0x38] sm:$0xff]
    %v498 = vld [vmem:[%s75 + $0x40] sm:$0xff]
    %v499 = vld [vmem:[%s75 + $0x48] sm:$0xff]
    %v500 = vld [vmem:[%s75 + $0x50] sm:$0xff]
    %v501 = vld [vmem:[%s75 + $0x58] sm:$0xff]
    %v502 = vld [vmem:[%s75 + $0x60] sm:$0xff]
    %v503 = vld [vmem:[%s75 + $0x68] sm:$0xff]
    %v504 = vld [vmem:[%s75 + $0x70] sm:$0xff]
    %v505 = vld [vmem:[%s75 + $0x78] sm:$0xff]
    %v506 = vld [vmem:[%s75 + $0x80] sm:$0xff]
    %v507 = vld [vmem:[%s75 + $0x88] sm:$0xff]
    %v508 = vld [vmem:[%s75 + $0x90] sm:$0xff]
    %v509 = vld [vmem:[%s75 + $0x98] sm:$0xff]
    %v510 = vld [vmem:[%s75 + $0xa0] sm:$0xff]
    %v511 = vld [vmem:[%s75 + $0xa8] sm:$0xff]
    %v512 = vld [vmem:[%s75 + $0xb0] sm:$0xff]
    %v513 = vld [vmem:[%s75 + $0xb8] sm:$0xff]
    %v514 = vld [vmem:[%s75 + $0xc0] sm:$0xff]
    %v515 = vld [vmem:[%s75 + $0xc8] sm:$0xff]
    %v516 = vld [vmem:[%s75 + $0xd0] sm:$0xff]
    %v517 = vld [vmem:[%s75 + $0xd8] sm:$0xff]
    %v518 = vld [vmem:[%s75 + $0xe0] sm:$0xff]
    %v519 = vld [vmem:[%s75 + $0xe8] sm:$0xff]
    %v520 = vld [vmem:[%s75 + $0xf0] sm:$0xff]
    %v521 = vld [vmem:[%s75 + $0xf8] sm:$0xff]
    %v522 = vpack.c.bf16 %v367, %v364
    %v523 = vpack.c.bf16 %v375, %v372
    %v524 = vpack.c.bf16 %v383, %v380
    %v525 = vpack.c.bf16 %v391, %v388
    %v526 = vpack.c.bf16 %v399, %v396
    %v527 = vpack.c.bf16 %v407, %v404
    %v528 = vpack.c.bf16 %v415, %v412
    %v529 = vpack.c.bf16 %v423, %v420
    %v530 = vpack.c.bf16 %v431, %v428
    %v531 = vpack.c.bf16 %v439, %v436
    %v532 = vpack.c.bf16 %v447, %v444
    %v533 = vpack.c.bf16 %v455, %v452
    %v534 = vpack.c.bf16 %v463, %v460
    %v535 = vpack.c.bf16 %v471, %v468
    %v536 = vpack.c.bf16 %v479, %v476
    %v537 = vpack.c.bf16 %v487, %v484
    %s538 = sadd.s32 0, 0
    %s539 = smul.u32 %s538, 128
    %s540 = sadd.s32 %s539, 0
    %s541 = sld [smem:[#allocation4 + %s540]]
    %p542 = scmp.eq.s32.totalorder %s541, 0
    %s543 = scalar_select %p542, 1.0, 0.0
    %v544 = vld [vmem:[#allocation2] sm:$0xff]
    %v545 = vld [vmem:[#allocation2 + $0x8] sm:$0xff]
    %v546 = vld [vmem:[#allocation2 + $0x10] sm:$0xff]
    %v547 = vld [vmem:[#allocation2 + $0x18] sm:$0xff]
    %v548 = vld [vmem:[#allocation2 + $0x20] sm:$0xff]
    %v549 = vld [vmem:[#allocation2 + $0x28] sm:$0xff]
    %v550 = vld [vmem:[#allocation2 + $0x30] sm:$0xff]
    %v551 = vld [vmem:[#allocation2 + $0x38] sm:$0xff]
    %v552 = vld [vmem:[#allocation2 + $0x40] sm:$0xff]
    %v553 = vld [vmem:[#allocation2 + $0x48] sm:$0xff]
    %v554 = vld [vmem:[#allocation2 + $0x50] sm:$0xff]
    %v555 = vld [vmem:[#allocation2 + $0x58] sm:$0xff]
    %v556 = vld [vmem:[#allocation2 + $0x60] sm:$0xff]
    %v557 = vld [vmem:[#allocation2 + $0x68] sm:$0xff]
    %v558 = vld [vmem:[#allocation2 + $0x70] sm:$0xff]
    %v559 = vld [vmem:[#allocation2 + $0x78] sm:$0xff]
    %v560 = vld [vmem:[#allocation2 + $0x80] sm:$0xff]
    %v561 = vld [vmem:[#allocation2 + $0x88] sm:$0xff]
    %v562 = vld [vmem:[#allocation2 + $0x90] sm:$0xff]
    %v563 = vld [vmem:[#allocation2 + $0x98] sm:$0xff]
    %v564 = vld [vmem:[#allocation2 + $0xa0] sm:$0xff]
    %v565 = vld [vmem:[#allocation2 + $0xa8] sm:$0xff]
    %v566 = vld [vmem:[#allocation2 + $0xb0] sm:$0xff]
    %v567 = vld [vmem:[#allocation2 + $0xb8] sm:$0xff]
    %v568 = vld [vmem:[#allocation2 + $0xc0] sm:$0xff]
    %v569 = vld [vmem:[#allocation2 + $0xc8] sm:$0xff]
    %v570 = vld [vmem:[#allocation2 + $0xd0] sm:$0xff]
    %v571 = vld [vmem:[#allocation2 + $0xd8] sm:$0xff]
    %v572 = vld [vmem:[#allocation2 + $0xe0] sm:$0xff]
    %v573 = vld [vmem:[#allocation2 + $0xe8] sm:$0xff]
    %v574 = vld [vmem:[#allocation2 + $0xf0] sm:$0xff]
    %v575 = vld [vmem:[#allocation2 + $0xf8] sm:$0xff]
    %v576 = vstv %s543
    %v577 = vmul.f32 %v576, %v364
    %v578 = vmul.f32 %v576, %v367
    %v579 = vmul.f32 %v576, %v372
    %v580 = vmul.f32 %v576, %v375
    %v581 = vmul.f32 %v576, %v380
    %v582 = vmul.f32 %v576, %v383
    %v583 = vmul.f32 %v576, %v388
    %v584 = vmul.f32 %v576, %v391
    %v585 = vmul.f32 %v576, %v396
    %v586 = vmul.f32 %v576, %v399
    %v587 = vmul.f32 %v576, %v404
    %v588 = vmul.f32 %v576, %v407
    %v589 = vmul.f32 %v576, %v412
    %v590 = vmul.f32 %v576, %v415
    %v591 = vmul.f32 %v576, %v420
    %v592 = vmul.f32 %v576, %v423
    %v593 = vmul.f32 %v576, %v428
    %v594 = vmul.f32 %v576, %v431
    %v595 = vmul.f32 %v576, %v436
    %v596 = vmul.f32 %v576, %v439
    %v597 = vmul.f32 %v576, %v444
    %v598 = vmul.f32 %v576, %v447
    %v599 = vmul.f32 %v576, %v452
    %v600 = vmul.f32 %v576, %v455
    %v601 = vmul.f32 %v576, %v460
    %v602 = vmul.f32 %v576, %v463
    %v603 = vmul.f32 %v576, %v468
    %v604 = vmul.f32 %v576, %v471
    %v605 = vmul.f32 %v576, %v476
    %v606 = vmul.f32 %v576, %v479
    %v607 = vmul.f32 %v576, %v484
    %v608 = vmul.f32 %v576, %v487
    %v641 = vunpack.c.l.b16 %v490
    %v642 = vunpack.c.h.b16 %v490
    %v643 = vunpack.c.l.b16 %v491
    %v644 = vunpack.c.h.b16 %v491
    %v645 = vunpack.c.l.b16 %v492
    %v646 = vunpack.c.h.b16 %v492
    %v647 = vunpack.c.l.b16 %v493
    %v648 = vunpack.c.h.b16 %v493
    %v649 = vunpack.c.l.b16 %v494
    %v650 = vunpack.c.h.b16 %v494
    %v651 = vunpack.c.l.b16 %v495
    %v652 = vunpack.c.h.b16 %v495
    %v653 = vunpack.c.l.b16 %v496
    %v654 = vunpack.c.h.b16 %v496
    %v655 = vunpack.c.l.b16 %v497
    %v656 = vunpack.c.h.b16 %v497
    %v657 = vunpack.c.l.b16 %v498
    %v658 = vunpack.c.h.b16 %v498
    %v659 = vunpack.c.l.b16 %v499
    %v660 = vunpack.c.h.b16 %v499
    %v661 = vunpack.c.l.b16 %v500
    %v662 = vunpack.c.h.b16 %v500
    %v663 = vunpack.c.l.b16 %v501
    %v664 = vunpack.c.h.b16 %v501
    %v665 = vunpack.c.l.b16 %v502
    %v666 = vunpack.c.h.b16 %v502
    %v667 = vunpack.c.l.b16 %v503
    %v668 = vunpack.c.h.b16 %v503
    %v669 = vunpack.c.l.b16 %v504
    %v670 = vunpack.c.h.b16 %v504
    %v671 = vunpack.c.l.b16 %v505
    %v672 = vunpack.c.h.b16 %v505
    %v673 = vunpack.c.l.b16 %v506
    %v674 = vunpack.c.h.b16 %v506
    %v675 = vunpack.c.l.b16 %v507
    %v676 = vunpack.c.h.b16 %v507
    %v677 = vunpack.c.l.b16 %v508
    %v678 = vunpack.c.h.b16 %v508
    %v679 = vunpack.c.l.b16 %v509
    %v680 = vunpack.c.h.b16 %v509
    %v681 = vunpack.c.l.b16 %v510
    %v682 = vunpack.c.h.b16 %v510
    %v683 = vunpack.c.l.b16 %v511
    %v684 = vunpack.c.h.b16 %v511
    %v685 = vunpack.c.l.b16 %v512
    %v686 = vunpack.c.h.b16 %v512
    %v687 = vunpack.c.l.b16 %v513
    %v688 = vunpack.c.h.b16 %v513
    %v689 = vunpack.c.l.b16 %v514
    %v690 = vunpack.c.h.b16 %v514
    %v691 = vunpack.c.l.b16 %v515
    %v692 = vunpack.c.h.b16 %v515
    %v693 = vunpack.c.l.b16 %v516
    %v694 = vunpack.c.h.b16 %v516
    %v695 = vunpack.c.l.b16 %v517
    %v696 = vunpack.c.h.b16 %v517
    %v697 = vunpack.c.l.b16 %v518
    %v698 = vunpack.c.h.b16 %v518
    %v699 = vunpack.c.l.b16 %v519
    %v700 = vunpack.c.h.b16 %v519
    %v701 = vunpack.c.l.b16 %v520
    %v702 = vunpack.c.h.b16 %v520
    %v703 = vunpack.c.l.b16 %v521
    %v704 = vunpack.c.h.b16 %v521
    %v705 = vpack.c.b16 %v643, %v641
    %v706 = vpack.c.b16 %v644, %v642
    %v707 = vpack.c.b16 %v647, %v645
    %v708 = vpack.c.b16 %v648, %v646
    %v709 = vpack.c.b16 %v651, %v649
    %v710 = vpack.c.b16 %v652, %v650
    %v711 = vpack.c.b16 %v655, %v653
    %v712 = vpack.c.b16 %v656, %v654
    %v713 = vpack.c.b16 %v659, %v657
    %v714 = vpack.c.b16 %v660, %v658
    %v715 = vpack.c.b16 %v663, %v661
    %v716 = vpack.c.b16 %v664, %v662
    %v717 = vpack.c.b16 %v667, %v665
    %v718 = vpack.c.b16 %v668, %v666
    %v719 = vpack.c.b16 %v671, %v669
    %v720 = vpack.c.b16 %v672, %v670
    %v721 = vpack.c.b16 %v675, %v673
    %v722 = vpack.c.b16 %v676, %v674
    %v723 = vpack.c.b16 %v679, %v677
    %v724 = vpack.c.b16 %v680, %v678
    %v725 = vpack.c.b16 %v683, %v681
    %v726 = vpack.c.b16 %v684, %v682
    %v727 = vpack.c.b16 %v687, %v685
    %v728 = vpack.c.b16 %v688, %v686
    %v729 = vpack.c.b16 %v691, %v689
    %v730 = vpack.c.b16 %v692, %v690
    %v731 = vpack.c.b16 %v695, %v693
    %v732 = vpack.c.b16 %v696, %v694
    %v733 = vpack.c.b16 %v699, %v697
    %v734 = vpack.c.b16 %v700, %v698
    %v735 = vpack.c.b16 %v703, %v701
    %v736 = vpack.c.b16 %v704, %v702
    %769 = vmatprep.subr.bf16.mxu0 0
    %770 = vmatpush1.bf16.msra.mxu0 %v529
    %771 = vmatprep.subr.bf16.mxu0 0
    %772 = vmatpush1.bf16.msra.mxu0 %v528
    %773 = vmatprep.subr.bf16.mxu0 0
    %774 = vmatpush1.bf16.msra.mxu0 %v527
    %775 = vmatprep.subr.bf16.mxu0 0
    %776 = vmatpush1.bf16.msra.mxu0 %v526
    %777 = vmatprep.subr.bf16.mxu0 0
    %778 = vmatpush1.bf16.msra.mxu0 %v525
    %779 = vmatprep.subr.bf16.mxu0 0
    %780 = vmatpush1.bf16.msra.mxu0 %v524
    %781 = vmatprep.subr.bf16.mxu0 0
    %782 = vmatpush1.bf16.msra.mxu0 %v523
    %783 = vmatprep.subr.bf16.mxu0 0
    %784 = vmatpush1.bf16.msra.mxu0 %v522
    %785 = vmatprep.subr.bf16.mxu0 0
    %786 = vmatpush2.bf16.msra.mxu0 %v537
    %787 = vmatprep.subr.bf16.mxu0 0
    %788 = vmatpush2.bf16.msra.mxu0 %v536
    %789 = vmatprep.subr.bf16.mxu0 0
    %790 = vmatpush2.bf16.msra.mxu0 %v535
    %791 = vmatprep.subr.bf16.mxu0 0
    %792 = vmatpush2.bf16.msra.mxu0 %v534
    %793 = vmatprep.subr.bf16.mxu0 0
    %794 = vmatpush2.bf16.msra.mxu0 %v533
    %795 = vmatprep.subr.bf16.mxu0 0
    %796 = vmatpush2.bf16.msra.mxu0 %v532
    %797 = vmatprep.subr.bf16.mxu0 0
    %798 = vmatpush2.bf16.msra.mxu0 %v531
    %799 = vmatprep.subr.bf16.mxu0 0
    %800 = vmatpush2.bf16.msra.mxu0 %v530
    %801 = vmatprep.mubr.bf16.mxu0 %v706
    %802 = vmatmul.mubr.bf16.gmra.mxu0 %v705
    %v803 = vpop.f32.mrf.mxu0
    %v804 = vadd.f32 %v577, %v803
    %v805 = vpop.f32.mrf.mxu0
    %v806 = vpop.f32.mrf.mxu0
    %v807 = vadd.f32 %v578, %v806
    %v808 = vpop.f32.mrf.mxu0
    %809 = vmatprep.mubr.bf16.mxu0 %v708
    %810 = vmatmul.mubr.bf16.gmra.mxu0 %v707
    %v811 = vpop.f32.mrf.mxu0
    %v812 = vadd.f32 %v579, %v811
    %v813 = vpop.f32.mrf.mxu0
    %v814 = vpop.f32.mrf.mxu0
    %v815 = vadd.f32 %v580, %v814
    %v816 = vpop.f32.mrf.mxu0
    %817 = vmatprep.mubr.bf16.mxu0 %v710
    %818 = vmatmul.mubr.bf16.gmra.mxu0 %v709
    %v819 = vpop.f32.mrf.mxu0
    %v820 = vadd.f32 %v581, %v819
    %v821 = vpop.f32.mrf.mxu0
    %v822 = vpop.f32.mrf.mxu0
    %v823 = vadd.f32 %v582, %v822
    %v824 = vpop.f32.mrf.mxu0
    %825 = vmatprep.mubr.bf16.mxu0 %v712
    %826 = vmatmul.mubr.bf16.gmra.mxu0 %v711
    %v827 = vpop.f32.mrf.mxu0
    %v828 = vadd.f32 %v583, %v827
    %v829 = vpop.f32.mrf.mxu0
    %v830 = vpop.f32.mrf.mxu0
    %v831 = vadd.f32 %v584, %v830
    %v832 = vpop.f32.mrf.mxu0
    %833 = vmatprep.mubr.bf16.mxu0 %v714
    %834 = vmatmul.mubr.bf16.gmra.mxu0 %v713
    %v835 = vpop.f32.mrf.mxu0
    %v836 = vadd.f32 %v585, %v835
    %v837 = vpop.f32.mrf.mxu0
    %v838 = vpop.f32.mrf.mxu0
    %v839 = vadd.f32 %v586, %v838
    %v840 = vpop.f32.mrf.mxu0
    %841 = vmatprep.mubr.bf16.mxu0 %v716
    %842 = vmatmul.mubr.bf16.gmra.mxu0 %v715
    %v843 = vpop.f32.mrf.mxu0
    %v844 = vadd.f32 %v587, %v843
    %v845 = vpop.f32.mrf.mxu0
    %v846 = vpop.f32.mrf.mxu0
    %v847 = vadd.f32 %v588, %v846
    %v848 = vpop.f32.mrf.mxu0
    %849 = vmatprep.mubr.bf16.mxu0 %v718
    %850 = vmatmul.mubr.bf16.gmra.mxu0 %v717
    %v851 = vpop.f32.mrf.mxu0
    %v852 = vadd.f32 %v589, %v851
    %v853 = vpop.f32.mrf.mxu0
    %v854 = vpop.f32.mrf.mxu0
    %v855 = vadd.f32 %v590, %v854
    %v856 = vpop.f32.mrf.mxu0
    %857 = vmatprep.mubr.bf16.mxu0 %v720
    %858 = vmatmul.mubr.bf16.gmra.mxu0 %v719
    %v859 = vpop.f32.mrf.mxu0
    %v860 = vadd.f32 %v591, %v859
    %v861 = vpop.f32.mrf.mxu0
    %v862 = vpop.f32.mrf.mxu0
    %v863 = vadd.f32 %v592, %v862
    %v864 = vpop.f32.mrf.mxu0
    %865 = vmatprep.mubr.bf16.mxu0 %v722
    %866 = vmatmul.mubr.bf16.gmra.mxu0 %v721
    %v867 = vpop.f32.mrf.mxu0
    %v868 = vadd.f32 %v593, %v867
    %v869 = vpop.f32.mrf.mxu0
    %v870 = vpop.f32.mrf.mxu0
    %v871 = vadd.f32 %v594, %v870
    %v872 = vpop.f32.mrf.mxu0
    %873 = vmatprep.mubr.bf16.mxu0 %v724
    %874 = vmatmul.mubr.bf16.gmra.mxu0 %v723
    %v875 = vpop.f32.mrf.mxu0
    %v876 = vadd.f32 %v595, %v875
    %v877 = vpop.f32.mrf.mxu0
    %v878 = vpop.f32.mrf.mxu0
    %v879 = vadd.f32 %v596, %v878
    %v880 = vpop.f32.mrf.mxu0
    %881 = vmatprep.mubr.bf16.mxu0 %v726
    %882 = vmatmul.mubr.bf16.gmra.mxu0 %v725
    %v883 = vpop.f32.mrf.mxu0
    %v884 = vadd.f32 %v597, %v883
    %v885 = vpop.f32.mrf.mxu0
    %v886 = vpop.f32.mrf.mxu0
    %v887 = vadd.f32 %v598, %v886
    %v888 = vpop.f32.mrf.mxu0
    %889 = vmatprep.mubr.bf16.mxu0 %v728
    %890 = vmatmul.mubr.bf16.gmra.mxu0 %v727
    %v891 = vpop.f32.mrf.mxu0
    %v892 = vadd.f32 %v599, %v891
    %v893 = vpop.f32.mrf.mxu0
    %v894 = vpop.f32.mrf.mxu0
    %v895 = vadd.f32 %v600, %v894
    %v896 = vpop.f32.mrf.mxu0
    %897 = vmatprep.mubr.bf16.mxu0 %v730
    %898 = vmatmul.mubr.bf16.gmra.mxu0 %v729
    %v899 = vpop.f32.mrf.mxu0
    %v900 = vadd.f32 %v601, %v899
    %v901 = vpop.f32.mrf.mxu0
    %v902 = vpop.f32.mrf.mxu0
    %v903 = vadd.f32 %v602, %v902
    %v904 = vpop.f32.mrf.mxu0
    %905 = vmatprep.mubr.bf16.mxu0 %v732
    %906 = vmatmul.mubr.bf16.gmra.mxu0 %v731
    %v907 = vpop.f32.mrf.mxu0
    %v908 = vadd.f32 %v603, %v907
    %v909 = vpop.f32.mrf.mxu0
    %v910 = vpop.f32.mrf.mxu0
    %v911 = vadd.f32 %v604, %v910
    %v912 = vpop.f32.mrf.mxu0
    %913 = vmatprep.mubr.bf16.mxu0 %v734
    %914 = vmatmul.mubr.bf16.gmra.mxu0 %v733
    %v915 = vpop.f32.mrf.mxu0
    %v916 = vadd.f32 %v605, %v915
    %v917 = vpop.f32.mrf.mxu0
    %v918 = vpop.f32.mrf.mxu0
    %v919 = vadd.f32 %v606, %v918
    %v920 = vpop.f32.mrf.mxu0
    %921 = vmatprep.mubr.bf16.mxu0 %v736
    %922 = vmatmul.mubr.bf16.gmra.mxu0 %v735
    %v923 = vpop.f32.mrf.mxu0
    %v924 = vadd.f32 %v607, %v923
    %v925 = vpop.f32.mrf.mxu0
    %v926 = vpop.f32.mrf.mxu0
    %v927 = vadd.f32 %v608, %v926
    %v928 = vpop.f32.mrf.mxu0
    %929 = vdwg.mxu0
    %v930 = vadd.f32 %v544, %v804
    %v931 = vadd.f32 %v545, %v807
    %v932 = vadd.f32 %v546, %v812
    %v933 = vadd.f32 %v547, %v815
    %v934 = vadd.f32 %v548, %v820
    %v935 = vadd.f32 %v549, %v823
    %v936 = vadd.f32 %v550, %v828
    %v937 = vadd.f32 %v551, %v831
    %v938 = vadd.f32 %v552, %v836
    %v939 = vadd.f32 %v553, %v839
    %v940 = vadd.f32 %v554, %v844
    %v941 = vadd.f32 %v555, %v847
    %v942 = vadd.f32 %v556, %v852
    %v943 = vadd.f32 %v557, %v855
    %v944 = vadd.f32 %v558, %v860
    %v945 = vadd.f32 %v559, %v863
    %v946 = vadd.f32 %v560, %v868
    %v947 = vadd.f32 %v561, %v871
    %v948 = vadd.f32 %v562, %v876
    %v949 = vadd.f32 %v563, %v879
    %v950 = vadd.f32 %v564, %v884
    %v951 = vadd.f32 %v565, %v887
    %v952 = vadd.f32 %v566, %v892
    %v953 = vadd.f32 %v567, %v895
    %v954 = vadd.f32 %v568, %v900
    %v955 = vadd.f32 %v569, %v903
    %v956 = vadd.f32 %v570, %v908
    %v957 = vadd.f32 %v571, %v911
    %v958 = vadd.f32 %v572, %v916
    %v959 = vadd.f32 %v573, %v919
    %v960 = vadd.f32 %v574, %v924
    %v961 = vadd.f32 %v575, %v927
    %962 = vst [vmem:[#allocation2] sm:$0xff] %v930
    %963 = vst [vmem:[#allocation2 + $0x8] sm:$0xff] %v931
    %964 = vst [vmem:[#allocation2 + $0x10] sm:$0xff] %v932
    %965 = vst [vmem:[#allocation2 + $0x18] sm:$0xff] %v933
    %966 = vst [vmem:[#allocation2 + $0x20] sm:$0xff] %v934
    %967 = vst [vmem:[#allocation2 + $0x28] sm:$0xff] %v935
    %968 = vst [vmem:[#allocation2 + $0x30] sm:$0xff] %v936
    %969 = vst [vmem:[#allocation2 + $0x38] sm:$0xff] %v937
    %970 = vst [vmem:[#allocation2 + $0x40] sm:$0xff] %v938
    %971 = vst [vmem:[#allocation2 + $0x48] sm:$0xff] %v939
    %972 = vst [vmem:[#allocation2 + $0x50] sm:$0xff] %v940
    %973 = vst [vmem:[#allocation2 + $0x58] sm:$0xff] %v941
    %974 = vst [vmem:[#allocation2 + $0x60] sm:$0xff] %v942
    %975 = vst [vmem:[#allocation2 + $0x68] sm:$0xff] %v943
    %976 = vst [vmem:[#allocation2 + $0x70] sm:$0xff] %v944
    %977 = vst [vmem:[#allocation2 + $0x78] sm:$0xff] %v945
    %978 = vst [vmem:[#allocation2 + $0x80] sm:$0xff] %v946
    %979 = vst [vmem:[#allocation2 + $0x88] sm:$0xff] %v947
    %980 = vst [vmem:[#allocation2 + $0x90] sm:$0xff] %v948
    %981 = vst [vmem:[#allocation2 + $0x98] sm:$0xff] %v949
    %982 = vst [vmem:[#allocation2 + $0xa0] sm:$0xff] %v950
    %983 = vst [vmem:[#allocation2 + $0xa8] sm:$0xff] %v951
    %984 = vst [vmem:[#allocation2 + $0xb0] sm:$0xff] %v952
    %985 = vst [vmem:[#allocation2 + $0xb8] sm:$0xff] %v953
    %986 = vst [vmem:[#allocation2 + $0xc0] sm:$0xff] %v954
    %987 = vst [vmem:[#allocation2 + $0xc8] sm:$0xff] %v955
    %988 = vst [vmem:[#allocation2 + $0xd0] sm:$0xff] %v956
    %989 = vst [vmem:[#allocation2 + $0xd8] sm:$0xff] %v957
    %990 = vst [vmem:[#allocation2 + $0xe0] sm:$0xff] %v958
    %991 = vst [vmem:[#allocation2 + $0xe8] sm:$0xff] %v959
    %992 = vst [vmem:[#allocation2 + $0xf0] sm:$0xff] %v960
    %993 = vst [vmem:[#allocation2 + $0xf8] sm:$0xff] %v961
  $region25: #{gin_forward.2} parent=0 // pred_fallthru
    _
  // Predicated region
  $region26: #{gin_forward.2} parent=0 // pred_check
    %p994 = pneg %p96
  $region27: #{gin_forward.2} parent=0 // pred_check_branch
    %996 = sbr.rel (%p994) target = $region29
  $region28: #{gin_forward.2} parent=0 // pred_region
    %v997 = vld [vmem:[#allocation2] sm:$0xff]
    %v998 = vld [vmem:[#allocation2 + $0x8] sm:$0xff]
    %v999 = vld [vmem:[#allocation2 + $0x10] sm:$0xff]
    %v1000 = vld [vmem:[#allocation2 + $0x18] sm:$0xff]
    %v1001 = vld [vmem:[#allocation2 + $0x20] sm:$0xff]
    %v1002 = vld [vmem:[#allocation2 + $0x28] sm:$0xff]
    %v1003 = vld [vmem:[#allocation2 + $0x30] sm:$0xff]
    %v1004 = vld [vmem:[#allocation2 + $0x38] sm:$0xff]
    %v1005 = vld [vmem:[#allocation2 + $0x40] sm:$0xff]
    %v1006 = vld [vmem:[#allocation2 + $0x48] sm:$0xff]
    %v1007 = vld [vmem:[#allocation2 + $0x50] sm:$0xff]
    %v1008 = vld [vmem:[#allocation2 + $0x58] sm:$0xff]
    %v1009 = vld [vmem:[#allocation2 + $0x60] sm:$0xff]
    %v1010 = vld [vmem:[#allocation2 + $0x68] sm:$0xff]
    %v1011 = vld [vmem:[#allocation2 + $0x70] sm:$0xff]
    %v1012 = vld [vmem:[#allocation2 + $0x78] sm:$0xff]
    %v1013 = vld [vmem:[#allocation2 + $0x80] sm:$0xff]
    %v1014 = vld [vmem:[#allocation2 + $0x88] sm:$0xff]
    %v1015 = vld [vmem:[#allocation2 + $0x90] sm:$0xff]
    %v1016 = vld [vmem:[#allocation2 + $0x98] sm:$0xff]
    %v1017 = vld [vmem:[#allocation2 + $0xa0] sm:$0xff]
    %v1018 = vld [vmem:[#allocation2 + $0xa8] sm:$0xff]
    %v1019 = vld [vmem:[#allocation2 + $0xb0] sm:$0xff]
    %v1020 = vld [vmem:[#allocation2 + $0xb8] sm:$0xff]
    %v1021 = vld [vmem:[#allocation2 + $0xc0] sm:$0xff]
    %v1022 = vld [vmem:[#allocation2 + $0xc8] sm:$0xff]
    %v1023 = vld [vmem:[#allocation2 + $0xd0] sm:$0xff]
    %v1024 = vld [vmem:[#allocation2 + $0xd8] sm:$0xff]
    %v1025 = vld [vmem:[#allocation2 + $0xe0] sm:$0xff]
    %v1026 = vld [vmem:[#allocation2 + $0xe8] sm:$0xff]
    %v1027 = vld [vmem:[#allocation2 + $0xf0] sm:$0xff]
    %v1028 = vld [vmem:[#allocation2 + $0xf8] sm:$0xff]
    %v1029 = vld [vmem:[%s5] sm:$0x1]
    %v1031 = vlaneseq
    %v1032 = vshrl.u32 %v1031, 7
    %v1033 = vsub.s32 0, %v1032
    %v1034 = vrot.slane %v1029, %v1033
    %v1036 = vadd.f32 %v997, %v1034
    %v1037 = vadd.f32 %v998, %v1034
    %v1038 = vadd.f32 %v999, %v1034
    %v1039 = vadd.f32 %v1000, %v1034
    %v1040 = vadd.f32 %v1001, %v1034
    %v1041 = vadd.f32 %v1002, %v1034
    %v1042 = vadd.f32 %v1003, %v1034
    %v1043 = vadd.f32 %v1004, %v1034
    %v1044 = vadd.f32 %v1005, %v1034
    %v1045 = vadd.f32 %v1006, %v1034
    %v1046 = vadd.f32 %v1007, %v1034
    %v1047 = vadd.f32 %v1008, %v1034
    %v1048 = vadd.f32 %v1009, %v1034
    %v1049 = vadd.f32 %v1010, %v1034
    %v1050 = vadd.f32 %v1011, %v1034
    %v1051 = vadd.f32 %v1012, %v1034
    %v1052 = vadd.f32 %v1013, %v1034
    %v1053 = vadd.f32 %v1014, %v1034
    %v1054 = vadd.f32 %v1015, %v1034
    %v1055 = vadd.f32 %v1016, %v1034
    %v1056 = vadd.f32 %v1017, %v1034
    %v1057 = vadd.f32 %v1018, %v1034
    %v1058 = vadd.f32 %v1019, %v1034
    %v1059 = vadd.f32 %v1020, %v1034
    %v1060 = vadd.f32 %v1021, %v1034
    %v1061 = vadd.f32 %v1022, %v1034
    %v1062 = vadd.f32 %v1023, %v1034
    %v1063 = vadd.f32 %v1024, %v1034
    %v1064 = vadd.f32 %v1025, %v1034
    %v1065 = vadd.f32 %v1026, %v1034
    %v1066 = vadd.f32 %v1027, %v1034
    %v1067 = vadd.f32 %v1028, %v1034
    %v1068 = vmax.f32 %v1036, 0.0
    %v1069 = vmax.f32 %v1037, 0.0
    %v1070 = vmax.f32 %v1038, 0.0
    %v1071 = vmax.f32 %v1039, 0.0
    %v1072 = vmax.f32 %v1040, 0.0
    %v1073 = vmax.f32 %v1041, 0.0
    %v1074 = vmax.f32 %v1042, 0.0
    %v1075 = vmax.f32 %v1043, 0.0
    %v1076 = vmax.f32 %v1044, 0.0
    %v1077 = vmax.f32 %v1045, 0.0
    %v1078 = vmax.f32 %v1046, 0.0
    %v1079 = vmax.f32 %v1047, 0.0
    %v1080 = vmax.f32 %v1048, 0.0
    %v1081 = vmax.f32 %v1049, 0.0
    %v1082 = vmax.f32 %v1050, 0.0
    %v1083 = vmax.f32 %v1051, 0.0
    %v1084 = vmax.f32 %v1052, 0.0
    %v1085 = vmax.f32 %v1053, 0.0
    %v1086 = vmax.f32 %v1054, 0.0
    %v1087 = vmax.f32 %v1055, 0.0
    %v1088 = vmax.f32 %v1056, 0.0
    %v1089 = vmax.f32 %v1057, 0.0
    %v1090 = vmax.f32 %v1058, 0.0
    %v1091 = vmax.f32 %v1059, 0.0
    %v1092 = vmax.f32 %v1060, 0.0
    %v1093 = vmax.f32 %v1061, 0.0
    %v1094 = vmax.f32 %v1062, 0.0
    %v1095 = vmax.f32 %v1063, 0.0
    %v1096 = vmax.f32 %v1064, 0.0
    %v1097 = vmax.f32 %v1065, 0.0
    %v1098 = vmax.f32 %v1066, 0.0
    %v1099 = vmax.f32 %v1067, 0.0
    %v1100 = vpack.c.bf16 %v1069, %v1068
    %v1101 = vpack.c.bf16 %v1071, %v1070
    %v1102 = vpack.c.bf16 %v1073, %v1072
    %v1103 = vpack.c.bf16 %v1075, %v1074
    %v1104 = vpack.c.bf16 %v1077, %v1076
    %v1105 = vpack.c.bf16 %v1079, %v1078
    %v1106 = vpack.c.bf16 %v1081, %v1080
    %v1107 = vpack.c.bf16 %v1083, %v1082
    %v1108 = vpack.c.bf16 %v1085, %v1084
    %v1109 = vpack.c.bf16 %v1087, %v1086
    %v1110 = vpack.c.bf16 %v1089, %v1088
    %v1111 = vpack.c.bf16 %v1091, %v1090
    %v1112 = vpack.c.bf16 %v1093, %v1092
    %v1113 = vpack.c.bf16 %v1095, %v1094
    %v1114 = vpack.c.bf16 %v1097, %v1096
    %v1115 = vpack.c.bf16 %v1099, %v1098
    %v1132 = vunpack.c.l.b16 %v1100
    %v1133 = vunpack.c.h.b16 %v1100
    %v1134 = vunpack.c.l.b16 %v1101
    %v1135 = vunpack.c.h.b16 %v1101
    %v1136 = vunpack.c.l.b16 %v1102
    %v1137 = vunpack.c.h.b16 %v1102
    %v1138 = vunpack.c.l.b16 %v1103
    %v1139 = vunpack.c.h.b16 %v1103
    %v1140 = vunpack.c.l.b16 %v1104
    %v1141 = vunpack.c.h.b16 %v1104
    %v1142 = vunpack.c.l.b16 %v1105
    %v1143 = vunpack.c.h.b16 %v1105
    %v1144 = vunpack.c.l.b16 %v1106
    %v1145 = vunpack.c.h.b16 %v1106
    %v1146 = vunpack.c.l.b16 %v1107
    %v1147 = vunpack.c.h.b16 %v1107
    %v1148 = vunpack.c.l.b16 %v1108
    %v1149 = vunpack.c.h.b16 %v1108
    %v1150 = vunpack.c.l.b16 %v1109
    %v1151 = vunpack.c.h.b16 %v1109
    %v1152 = vunpack.c.l.b16 %v1110
    %v1153 = vunpack.c.h.b16 %v1110
    %v1154 = vunpack.c.l.b16 %v1111
    %v1155 = vunpack.c.h.b16 %v1111
    %v1156 = vunpack.c.l.b16 %v1112
    %v1157 = vunpack.c.h.b16 %v1112
    %v1158 = vunpack.c.l.b16 %v1113
    %v1159 = vunpack.c.h.b16 %v1113
    %v1160 = vunpack.c.l.b16 %v1114
    %v1161 = vunpack.c.h.b16 %v1114
    %v1162 = vunpack.c.l.b16 %v1115
    %v1163 = vunpack.c.h.b16 %v1115
    %v1164 = vpack.c.b16 %v1132, %v1132
    %v1165 = vpack.c.b16 %v1133, %v1133
    %v1166 = vpack.c.b16 %v1134, %v1134
    %v1167 = vpack.c.b16 %v1135, %v1135
    %v1168 = vpack.c.b16 %v1136, %v1136
    %v1169 = vpack.c.b16 %v1137, %v1137
    %v1170 = vpack.c.b16 %v1138, %v1138
    %v1171 = vpack.c.b16 %v1139, %v1139
    %v1172 = vpack.c.b16 %v1140, %v1140
    %v1173 = vpack.c.b16 %v1141, %v1141
    %v1174 = vpack.c.b16 %v1142, %v1142
    %v1175 = vpack.c.b16 %v1143, %v1143
    %v1176 = vpack.c.b16 %v1144, %v1144
    %v1177 = vpack.c.b16 %v1145, %v1145
    %v1178 = vpack.c.b16 %v1146, %v1146
    %v1179 = vpack.c.b16 %v1147, %v1147
    %v1180 = vpack.c.b16 %v1148, %v1148
    %v1181 = vpack.c.b16 %v1149, %v1149
    %v1182 = vpack.c.b16 %v1150, %v1150
    %v1183 = vpack.c.b16 %v1151, %v1151
    %v1184 = vpack.c.b16 %v1152, %v1152
    %v1185 = vpack.c.b16 %v1153, %v1153
    %v1186 = vpack.c.b16 %v1154, %v1154
    %v1187 = vpack.c.b16 %v1155, %v1155
    %v1188 = vpack.c.b16 %v1156, %v1156
    %v1189 = vpack.c.b16 %v1157, %v1157
    %v1190 = vpack.c.b16 %v1158, %v1158
    %v1191 = vpack.c.b16 %v1159, %v1159
    %v1192 = vpack.c.b16 %v1160, %v1160
    %v1193 = vpack.c.b16 %v1161, %v1161
    %v1194 = vpack.c.b16 %v1162, %v1162
    %v1195 = vpack.c.b16 %v1163, %v1163
    %1228 = vst [vmem:[%s6] sm:$0xf] %v1164
    %1229 = vst [vmem:[%s6 + $0x4] sm:$0xf] %v1165
    %1230 = vst [vmem:[%s6 + $0x8] sm:$0xf] %v1166
    %1231 = vst [vmem:[%s6 + $0xc] sm:$0xf] %v1167
    %1232 = vst [vmem:[%s6 + $0x10] sm:$0xf] %v1168
    %1233 = vst [vmem:[%s6 + $0x14] sm:$0xf] %v1169
    %1234 = vst [vmem:[%s6 + $0x18] sm:$0xf] %v1170
    %1235 = vst [vmem:[%s6 + $0x1c] sm:$0xf] %v1171
    %1236 = vst [vmem:[%s6 + $0x20] sm:$0xf] %v1172
    %1237 = vst [vmem:[%s6 + $0x24] sm:$0xf] %v1173
    %1238 = vst [vmem:[%s6 + $0x28] sm:$0xf] %v1174
    %1239 = vst [vmem:[%s6 + $0x2c] sm:$0xf] %v1175
    %1240 = vst [vmem:[%s6 + $0x30] sm:$0xf] %v1176
    %1241 = vst [vmem:[%s6 + $0x34] sm:$0xf] %v1177
    %1242 = vst [vmem:[%s6 + $0x38] sm:$0xf] %v1178
    %1243 = vst [vmem:[%s6 + $0x3c] sm:$0xf] %v1179
    %1244 = vst [vmem:[%s6 + $0x40] sm:$0xf] %v1180
    %1245 = vst [vmem:[%s6 + $0x44] sm:$0xf] %v1181
    %1246 = vst [vmem:[%s6 + $0x48] sm:$0xf] %v1182
    %1247 = vst [vmem:[%s6 + $0x4c] sm:$0xf] %v1183
    %1248 = vst [vmem:[%s6 + $0x50] sm:$0xf] %v1184
    %1249 = vst [vmem:[%s6 + $0x54] sm:$0xf] %v1185
    %1250 = vst [vmem:[%s6 + $0x58] sm:$0xf] %v1186
    %1251 = vst [vmem:[%s6 + $0x5c] sm:$0xf] %v1187
    %1252 = vst [vmem:[%s6 + $0x60] sm:$0xf] %v1188
    %1253 = vst [vmem:[%s6 + $0x64] sm:$0xf] %v1189
    %1254 = vst [vmem:[%s6 + $0x68] sm:$0xf] %v1190
    %1255 = vst [vmem:[%s6 + $0x6c] sm:$0xf] %v1191
    %1256 = vst [vmem:[%s6 + $0x70] sm:$0xf] %v1192
    %1257 = vst [vmem:[%s6 + $0x74] sm:$0xf] %v1193
    %1258 = vst [vmem:[%s6 + $0x78] sm:$0xf] %v1194
    %1259 = vst [vmem:[%s6 + $0x7c] sm:$0xf] %v1195
  $region29: #{gin_forward.2} parent=0 // pred_fallthru
    _
  // Predicated region
  $region30: #{gin_forward.2} parent=0 // pred_check
    _
  $region31: #{gin_forward.2} parent=0 // pred_check_branch
    %1261 = sbr.rel (0) target = $region33
  $region32: #{gin_forward.2} parent=0 // pred_region
    _
  $region33: #{gin_forward.2} parent=0 // pred_fallthru
    _
  // Predicated region
  $region34: #{gin_forward.2} parent=0 // pred_check
    _
  $region35: #{gin_forward.2} parent=0 // pred_check_branch
    %1263 = sbr.rel (0) target = $region37
  $region36: #{gin_forward.2} parent=0 // pred_region
    _
  $region37: #{gin_forward.2} parent=0 // pred_fallthru
    _

</llo_original>
